<compile_context>
chip_gen: v5e
topology: v5e:2x2
jax: 0.10.0
libtpu: 0.0.40
codegen_flags: <defaults>
</compile_context>

<pallas_src>
import jax
import jax.numpy as jnp
from jax import lax
from jax.experimental import pallas as pl
from jax.experimental.pallas import tpu as pltpu


def _lstm_decoder_kernel(x_ref, wx1_ref, wh1_ref, b1_ref,
                         wx2_ref, wh2_ref, b2_ref, wout_ref, bout_ref,
                         out_ref, h2_scratch):
    # x_ref:    (B, E)       raw input, one row per batch element
    # wx1_ref:  (E, 4E)      lstm1 input weights,  gate order [i,f,o,g], i/f/o cols pre-scaled 0.5
    # wh1_ref:  (E, 4E)      lstm1 hidden weights, same layout
    # b1_ref:   (1, 4E)      lstm1 combined bias (bias_ih + bias_hh), same layout
    # wx2_ref:  (E, 4H)      lstm2 input weights  (H = 2E), same layout
    # wh2_ref:  (H, 4H)      lstm2 hidden weights, same layout
    # b2_ref:   (1, 4H)      lstm2 combined bias, same layout
    # wout_ref: (H, nf), bout_ref: (1, nf)
    # out_ref:  (B*T, nf)    row b*T + t  == output[b, t]  (batch-first after wrapper reshape)
    # h2_scratch: (B*T, H)   VMEM scratch holding the h2 states in b-major order
    B, E = x_ref.shape
    H = wh2_ref.shape[0]
    BT, nf = out_ref.shape
    T = BT // B

    wh1 = wh1_ref[...]
    wx2 = wx2_ref[...]
    wh2 = wh2_ref[...]
    # Hoist the bias broadcast out of the recurrence (broadcast_in_dim is not CSE'd by JAX).
    b2 = jnp.broadcast_to(b2_ref[...], (B, 4 * H))

    # ---- Prologue: hoisted layer-1 input projection (+ bias). Only B distinct rows exist. ----
    xw1 = jnp.dot(x_ref[...], wx1_ref[...],
                  preferred_element_type=jnp.float32) + b1_ref[...]        # (B, 4E)

    # PyTorch's repeat(T,1,1).reshape(-1,T,E): row (b, t) of the repeated input is
    # x[(b*T + t) % B]. T and B are static, so the gather is resolved at trace time.
    def xw1_at_step(t):
        idx = [(b * T + t) % B for b in range(B)]
        if idx == list(range(B)):
            return xw1                                                    # identity gather
        if all(i == idx[0] for i in idx):
            return jnp.broadcast_to(xw1[idx[0]:idx[0] + 1, :], (B, xw1.shape[1]))
        return jnp.concatenate([xw1[i:i + 1, :] for i in idx], axis=0)

    xg = [xw1_at_step(t) for t in range(T)]

    def lstm_gates(gates, hid, c):
        # Gate order [i, f, o, g] with i/f/o pre-activations pre-scaled by 0.5 at prep time:
        # sigmoid(z) = 0.5*tanh(0.5*z)+0.5 becomes a single 4*hid-wide tanh (one EUP pass per
        # cell) plus one VPU fma — no exp + dependent reciprocal on the critical path.
        t_all = jnp.tanh(gates)
        s = 0.5 * t_all[:, :3 * hid] + 0.5
        i_g = s[:, 0 * hid:1 * hid]
        f_g = s[:, 1 * hid:2 * hid]
        o_g = s[:, 2 * hid:3 * hid]
        g_g = t_all[:, 3 * hid:4 * hid]
        c_new = f_g * c + i_g * g_g
        h_new = o_g * jnp.tanh(c_new)
        return h_new, c_new

    h1 = jnp.zeros((B, E), jnp.float32)
    c1 = jnp.zeros((B, E), jnp.float32)
    c2 = jnp.zeros((B, H), jnp.float32)
    # Layer-2 recurrent half carried from the previous step's tail (h2_0 == 0 -> just the bias),
    # so h2 @ wh2 overlaps with the NEXT step's layer-1 matmul/gates instead of following them.
    pre2 = b2

    # ---- Statically unrolled recurrence (switch to lax.fori_loop(unroll=True) if T grows). ----
    for t in range(T):
        g1 = xg[t] + jnp.dot(h1, wh1, preferred_element_type=jnp.float32)
        h1, c1 = lstm_gates(g1, E, c1)
        g2 = pre2 + jnp.dot(h1, wx2, preferred_element_type=jnp.float32)
        h2, c2 = lstm_gates(g2, H, c2)
        if t + 1 < T:
            pre2 = jnp.dot(h2, wh2, preferred_element_type=jnp.float32) + b2
        # Stash h2 rows in b-major order (row b*T + t); these stores are off the serial chain.
        for b in range(B):
            h2_scratch[b * T + t, :] = h2[b, :]

    # ---- Epilogue: ONE stacked output matmul + ONE dense store (no per-row slicing). ----
    y = jnp.dot(h2_scratch[...], wout_ref[...],
                preferred_element_type=jnp.float32) + bout_ref[...]        # (B*T, nf)
    out_ref[...] = y.astype(out_ref.dtype)


def init_params(key, embedding_dim, n_features=1):
    """Deterministic synthetic parameters matching nn.LSTM / nn.Linear shapes (pre-transposed,
    PyTorch gate order [i, f, g, o], combined ih+hh biases)."""
    E = embedding_dim
    H = 2 * E
    ks = jax.random.split(key, 8)
    s1 = 1.0 / (E ** 0.5)
    s2 = 1.0 / (H ** 0.5)

    def u(k, shape, s):
        return jax.random.uniform(k, shape, jnp.float32, -s, s)

    return dict(
        wx1=u(ks[0], (E, 4 * E), s1),        # = lstm1.weight_ih_l0.T
        wh1=u(ks[1], (E, 4 * E), s1),        # = lstm1.weight_hh_l0.T
        b1=u(ks[2], (1, 4 * E), s1),         # = bias_ih_l0 + bias_hh_l0 (combined)
        wx2=u(ks[3], (E, 4 * H), s2),        # = lstm2.weight_ih_l0.T
        wh2=u(ks[4], (H, 4 * H), s2),        # = lstm2.weight_hh_l0.T
        b2=u(ks[5], (1, 4 * H), s2),
        wout=u(ks[6], (H, n_features), s2),  # = output_layer.weight.T
        bout=u(ks[7], (1, n_features), s2),
    )


def _reorder_and_prescale(w):
    # PyTorch gate-column order [i, f, g, o] -> kernel order [i, f, o, g], with the sigmoid
    # gates (i, f, o) pre-scaled by 0.5 so sigmoid(z) = 0.5*tanh(0.5*z) + 0.5 needs no in-kernel
    # argument scaling (power-of-two scaling of linear params is exact, so semantics unchanged).
    i_, f_, g_, o_ = jnp.split(w, 4, axis=-1)
    return jnp.concatenate([0.5 * i_, 0.5 * f_, 0.5 * o_, g_], axis=-1)


def prepare_params(params):
    """One-time conversion from PyTorch-layout params to the gate-reordered / pre-scaled kernel
    layout. Any real-checkpoint import path must go through this function.
    For large embedding_dim, also switch weights to bf16 and/or raise
    pltpu.CompilerParams(vmem_limit_bytes=...) (v7x: 64 MiB physical VMEM; v5e: 16 MiB default
    scoped limit)."""
    return dict(
        wx1=_reorder_and_prescale(params["wx1"]),
        wh1=_reorder_and_prescale(params["wh1"]),
        b1=_reorder_and_prescale(params["b1"]),
        wx2=_reorder_and_prescale(params["wx2"]),
        wh2=_reorder_and_prescale(params["wh2"]),
        b2=_reorder_and_prescale(params["b2"]),
        wout=params["wout"],
        bout=params["bout"],
    )


def lstm_decoder_forward(x, kparams, seq_len):
    """x: (batch, embedding_dim) f32 -> (batch, seq_len, n_features).
    kparams must come from prepare_params()."""
    B, E = x.shape
    H = kparams["wh2"].shape[0]
    nf = kparams["wout"].shape[1]
    T = int(seq_len)
    vmem = pl.BlockSpec(memory_space=pltpu.MemorySpace.VMEM)

    # Advisory cost estimate: wall clock is the serial recurrence latency, not bytes.
    flops = (2 * B * E * 4 * E                                    # prologue x @ wx1
             + 2 * T * B * (E * 4 * E + E * 4 * H + H * 4 * H)    # per-step recurrence matmuls
             + 2 * B * T * H * nf)                                # stacked output projection
    transcendentals = T * B * (5 * E + 5 * H)                     # tanh(gates) + tanh(c) per cell
    bytes_accessed = 4 * (B * E + 2 * E * 4 * E + 4 * E + (E + H) * 4 * H + 4 * H
                          + H * nf + nf + B * T * nf)

    # NOTE: on v7x (2 TCs/chip) a grid=(B,) with dimension_semantics=("parallel",) would shard
    # independent batch rows across TensorCores (~2x); intentionally not done here because it
    # only serializes the rows (+ per-step overhead) on single-TC v5e/v6e.
    y_flat = pl.pallas_call(
        _lstm_decoder_kernel,
        out_shape=jax.ShapeDtypeStruct((B * T, nf), jnp.float32),
        in_specs=[vmem] * 9,
        out_specs=vmem,
        scratch_shapes=[pltpu.VMEM((B * T, H), jnp.float32)],
        cost_estimate=pl.CostEstimate(flops=int(flops),
                                      transcendentals=int(transcendentals),
                                      bytes_accessed=int(bytes_accessed)),
    )(x, kparams["wx1"], kparams["wh1"], kparams["b1"],
      kparams["wx2"], kparams["wh2"], kparams["b2"],
      kparams["wout"], kparams["bout"])
    # Free reshape of the contiguous (B*T, nf) slab into the batch-first PyTorch layout.
    return y_flat.reshape(B, T, nf)


def lstm_decoder_ref(x, params, seq_len):
    """Pure-JAX reference in the original PyTorch layout (separate weights, [i,f,g,o] gates,
    exp-based sigmoid, explicit repeat/reshape) — validates gate reorder / pre-scale / split /
    hoisting inside the kernel."""
    B, E = x.shape
    H = params["wh2"].shape[0]
    x_rep = jnp.tile(x, (seq_len, 1, 1)).reshape(-1, seq_len, E)
    x_tbe = jnp.transpose(x_rep, (1, 0, 2))

    def cell(x_t, h, c, wx, wh, b, hid):
        gates = x_t @ wx + h @ wh + b
        i_g = jax.nn.sigmoid(gates[:, :hid])
        f_g = jax.nn.sigmoid(gates[:, hid:2 * hid])
        g_g = jnp.tanh(gates[:, 2 * hid:3 * hid])
        o_g = jax.nn.sigmoid(gates[:, 3 * hid:])
        c_new = f_g * c + i_g * g_g
        return o_g * jnp.tanh(c_new), c_new

    def step(carry, x_t):
        h1, c1, h2, c2 = carry
        h1, c1 = cell(x_t, h1, c1, params["wx1"], params["wh1"], params["b1"], E)
        h2, c2 = cell(h1, h2, c2, params["wx2"], params["wh2"], params["b2"], H)
        y = h2 @ params["wout"] + params["bout"]
        return (h1, c1, h2, c2), y

    init = (jnp.zeros((B, E), jnp.float32), jnp.zeros((B, E), jnp.float32),
            jnp.zeros((B, H), jnp.float32), jnp.zeros((B, H), jnp.float32))
    _, ys = lax.scan(step, init, x_tbe)            # (T, B, nf)
    return jnp.transpose(ys, (1, 0, 2))


if __name__ == "__main__":
    batch, embedding_dim, seq_len, n_features = 2, 32, 8, 1

    key = jax.random.PRNGKey(0)
    kx, kp, kx2 = jax.random.split(key, 3)
    x = jax.random.normal(kx, (batch, embedding_dim), jnp.float32)
    params = init_params(kp, embedding_dim, n_features)
    kparams = prepare_params(params)               # one-time weight prep, outside the hot path

    y = jax.block_until_ready(lstm_decoder_forward(x, kparams, seq_len))
    y_ref = jax.block_until_ready(lstm_decoder_ref(x, params, seq_len))
    assert y.shape == (batch, seq_len, n_features), y.shape
    assert jnp.allclose(y, y_ref, atol=1e-4, rtol=1e-4), "kernel mismatch vs reference"

    # Second config (B=3, T=5) exercises the general (non-broadcast) repeat-interleave gather
    # path and non-trivial b-major scratch indexing.
    x2 = jax.random.normal(kx2, (3, embedding_dim), jnp.float32)
    y2 = jax.block_until_ready(lstm_decoder_forward(x2, kparams, 5))
    y2_ref = jax.block_until_ready(lstm_decoder_ref(x2, params, 5))
    assert y2.shape == (3, 5, n_features), y2.shape
    assert jnp.allclose(y2, y2_ref, atol=1e-4, rtol=1e-4), "kernel mismatch vs reference (B=3)"

    print("KERNEL_OK")
</pallas_src>

<mosaic_0001>
module attributes {stable_mosaic.version = 11 : i64} {
  func.func @_lstm_decoder_kernel(%arg0: memref<2x32xf32, #tpu.memory_space<vmem>>, %arg1: memref<32x128xf32, #tpu.memory_space<vmem>>, %arg2: memref<32x128xf32, #tpu.memory_space<vmem>>, %arg3: memref<1x128xf32, #tpu.memory_space<vmem>>, %arg4: memref<32x256xf32, #tpu.memory_space<vmem>>, %arg5: memref<64x256xf32, #tpu.memory_space<vmem>>, %arg6: memref<1x256xf32, #tpu.memory_space<vmem>>, %arg7: memref<64x1xf32, #tpu.memory_space<vmem>>, %arg8: memref<1x1xf32, #tpu.memory_space<vmem>>, %arg9: memref<16x1xf32, #tpu.memory_space<vmem>>, %arg10: memref<16x64xf32, #tpu.memory_space<vmem>>) attributes {dimension_semantics = [], scalar_prefetch = 0 : i64, scratch_operands = 1 : i64, tpu.core_type = #tpu.core_type<tc>} {
    %c0 = arith.constant 0 : index
    %c0_0 = arith.constant 0 : index
    %0 = vector.load %arg2[%c0, %c0_0] : memref<32x128xf32, #tpu.memory_space<vmem>>, vector<32x128xf32>
    %c0_1 = arith.constant 0 : index
    %c0_2 = arith.constant 0 : index
    %1 = vector.load %arg4[%c0_1, %c0_2] : memref<32x256xf32, #tpu.memory_space<vmem>>, vector<32x256xf32>
    %c0_3 = arith.constant 0 : index
    %c0_4 = arith.constant 0 : index
    %2 = vector.load %arg5[%c0_3, %c0_4] : memref<64x256xf32, #tpu.memory_space<vmem>>, vector<64x256xf32>
    %c0_5 = arith.constant 0 : index
    %c0_6 = arith.constant 0 : index
    %3 = vector.load %arg6[%c0_5, %c0_6] : memref<1x256xf32, #tpu.memory_space<vmem>>, vector<1x256xf32>
    %4 = vector.shape_cast %3 : vector<1x256xf32> to vector<1x256xf32>
    %5 = vector.broadcast %4 : vector<1x256xf32> to vector<2x256xf32>
    %c0_7 = arith.constant 0 : index
    %c0_8 = arith.constant 0 : index
    %6 = vector.load %arg0[%c0_7, %c0_8] : memref<2x32xf32, #tpu.memory_space<vmem>>, vector<2x32xf32>
    %c0_9 = arith.constant 0 : index
    %c0_10 = arith.constant 0 : index
    %7 = vector.load %arg1[%c0_9, %c0_10] : memref<32x128xf32, #tpu.memory_space<vmem>>, vector<32x128xf32>
    %cst = arith.constant dense<0.000000e+00> : vector<2x128xf32>
    %8 = tpu.matmul %6, %7, %cst {dimension_numbers = #tpu.dot_dimension_numbers<[1], [0], [0], [1], [0, 0, 1, 1], [], []>} : vector<2x32xf32>, vector<32x128xf32>, vector<2x128xf32> -> vector<2x128xf32>
    %c0_11 = arith.constant 0 : index
    %c0_12 = arith.constant 0 : index
    %9 = vector.load %arg3[%c0_11, %c0_12] : memref<1x128xf32, #tpu.memory_space<vmem>>, vector<1x128xf32>
    %10 = vector.broadcast %9 : vector<1x128xf32> to vector<2x128xf32>
    %11 = arith.addf %8, %10 : vector<2x128xf32>
    %12 = vector.extract_strided_slice %11 {offsets = [0, 0], sizes = [1, 128], strides = [1, 1]} : vector<2x128xf32> to vector<1x128xf32>
    %13 = vector.shape_cast %12 : vector<1x128xf32> to vector<1x128xf32>
    %14 = vector.broadcast %13 : vector<1x128xf32> to vector<2x128xf32>
    %15 = vector.extract_strided_slice %11 {offsets = [1, 0], sizes = [1, 128], strides = [1, 1]} : vector<2x128xf32> to vector<1x128xf32>
    %16 = vector.shape_cast %15 : vector<1x128xf32> to vector<1x128xf32>
    %17 = vector.broadcast %16 : vector<1x128xf32> to vector<2x128xf32>
    %18 = vector.extract_strided_slice %11 {offsets = [0, 0], sizes = [1, 128], strides = [1, 1]} : vector<2x128xf32> to vector<1x128xf32>
    %19 = vector.shape_cast %18 : vector<1x128xf32> to vector<1x128xf32>
    %20 = vector.broadcast %19 : vector<1x128xf32> to vector<2x128xf32>
    %21 = vector.extract_strided_slice %11 {offsets = [1, 0], sizes = [1, 128], strides = [1, 1]} : vector<2x128xf32> to vector<1x128xf32>
    %22 = vector.shape_cast %21 : vector<1x128xf32> to vector<1x128xf32>
    %23 = vector.broadcast %22 : vector<1x128xf32> to vector<2x128xf32>
    %24 = vector.extract_strided_slice %11 {offsets = [0, 0], sizes = [1, 128], strides = [1, 1]} : vector<2x128xf32> to vector<1x128xf32>
    %25 = vector.shape_cast %24 : vector<1x128xf32> to vector<1x128xf32>
    %26 = vector.broadcast %25 : vector<1x128xf32> to vector<2x128xf32>
    %27 = vector.extract_strided_slice %11 {offsets = [1, 0], sizes = [1, 128], strides = [1, 1]} : vector<2x128xf32> to vector<1x128xf32>
    %28 = vector.shape_cast %27 : vector<1x128xf32> to vector<1x128xf32>
    %29 = vector.broadcast %28 : vector<1x128xf32> to vector<2x128xf32>
    %30 = vector.extract_strided_slice %11 {offsets = [0, 0], sizes = [1, 128], strides = [1, 1]} : vector<2x128xf32> to vector<1x128xf32>
    %31 = vector.shape_cast %30 : vector<1x128xf32> to vector<1x128xf32>
    %32 = vector.broadcast %31 : vector<1x128xf32> to vector<2x128xf32>
    %33 = vector.extract_strided_slice %11 {offsets = [1, 0], sizes = [1, 128], strides = [1, 1]} : vector<2x128xf32> to vector<1x128xf32>
    %34 = vector.shape_cast %33 : vector<1x128xf32> to vector<1x128xf32>
    %35 = vector.broadcast %34 : vector<1x128xf32> to vector<2x128xf32>
    %cst_13 = arith.constant 0.000000e+00 : f32
    %36 = vector.broadcast %cst_13 : f32 to vector<2x32xf32>
    %cst_14 = arith.constant 0.000000e+00 : f32
    %37 = vector.broadcast %cst_14 : f32 to vector<2x32xf32>
    %cst_15 = arith.constant 0.000000e+00 : f32
    %38 = vector.broadcast %cst_15 : f32 to vector<2x64xf32>
    %cst_16 = arith.constant dense<0.000000e+00> : vector<2x128xf32>
    %39 = tpu.matmul %36, %0, %cst_16 {dimension_numbers = #tpu.dot_dimension_numbers<[1], [0], [0], [1], [0, 0, 1, 1], [], []>} : vector<2x32xf32>, vector<32x128xf32>, vector<2x128xf32> -> vector<2x128xf32>
    %40 = arith.addf %14, %39 : vector<2x128xf32>
    %41 = math.tanh %40 : vector<2x128xf32>
    %42 = vector.extract_strided_slice %41 {offsets = [0, 0], sizes = [2, 96], strides = [1, 1]} : vector<2x128xf32> to vector<2x96xf32>
    %cst_17 = arith.constant 5.000000e-01 : f32
    %43 = vector.broadcast %cst_17 : f32 to vector<2x96xf32>
    %44 = arith.mulf %43, %42 : vector<2x96xf32>
    %cst_18 = arith.constant 5.000000e-01 : f32
    %45 = vector.broadcast %cst_18 : f32 to vector<2x96xf32>
    %46 = arith.addf %44, %45 : vector<2x96xf32>
    %47 = vector.extract_strided_slice %46 {offsets = [0, 0], sizes = [2, 32], strides = [1, 1]} : vector<2x96xf32> to vector<2x32xf32>
    %48 = vector.extract_strided_slice %46 {offsets = [0, 32], sizes = [2, 32], strides = [1, 1]} : vector<2x96xf32> to vector<2x32xf32>
    %49 = vector.extract_strided_slice %46 {offsets = [0, 64], sizes = [2, 32], strides = [1, 1]} : vector<2x96xf32> to vector<2x32xf32>
    %50 = vector.extract_strided_slice %41 {offsets = [0, 96], sizes = [2, 32], strides = [1, 1]} : vector<2x128xf32> to vector<2x32xf32>
    %51 = arith.mulf %48, %37 : vector<2x32xf32>
    %52 = arith.mulf %47, %50 : vector<2x32xf32>
    %53 = arith.addf %51, %52 : vector<2x32xf32>
    %54 = math.tanh %53 : vector<2x32xf32>
    %55 = arith.mulf %49, %54 : vector<2x32xf32>
    %cst_19 = arith.constant dense<0.000000e+00> : vector<2x256xf32>
    %56 = tpu.matmul %55, %1, %cst_19 {dimension_numbers = #tpu.dot_dimension_numbers<[1], [0], [0], [1], [0, 0, 1, 1], [], []>} : vector<2x32xf32>, vector<32x256xf32>, vector<2x256xf32> -> vector<2x256xf32>
    %57 = arith.addf %5, %56 : vector<2x256xf32>
    %58 = math.tanh %57 : vector<2x256xf32>
    %59 = vector.extract_strided_slice %58 {offsets = [0, 0], sizes = [2, 192], strides = [1, 1]} : vector<2x256xf32> to vector<2x192xf32>
    %cst_20 = arith.constant 5.000000e-01 : f32
    %60 = vector.broadcast %cst_20 : f32 to vector<2x192xf32>
    %61 = arith.mulf %60, %59 : vector<2x192xf32>
    %cst_21 = arith.constant 5.000000e-01 : f32
    %62 = vector.broadcast %cst_21 : f32 to vector<2x192xf32>
    %63 = arith.addf %61, %62 : vector<2x192xf32>
    %64 = vector.extract_strided_slice %63 {offsets = [0, 0], sizes = [2, 64], strides = [1, 1]} : vector<2x192xf32> to vector<2x64xf32>
    %65 = vector.extract_strided_slice %63 {offsets = [0, 64], sizes = [2, 64], strides = [1, 1]} : vector<2x192xf32> to vector<2x64xf32>
    %66 = vector.extract_strided_slice %63 {offsets = [0, 128], sizes = [2, 64], strides = [1, 1]} : vector<2x192xf32> to vector<2x64xf32>
    %67 = vector.extract_strided_slice %58 {offsets = [0, 192], sizes = [2, 64], strides = [1, 1]} : vector<2x256xf32> to vector<2x64xf32>
    %68 = arith.mulf %65, %38 : vector<2x64xf32>
    %69 = arith.mulf %64, %67 : vector<2x64xf32>
    %70 = arith.addf %68, %69 : vector<2x64xf32>
    %71 = math.tanh %70 : vector<2x64xf32>
    %72 = arith.mulf %66, %71 : vector<2x64xf32>
    %cst_22 = arith.constant dense<0.000000e+00> : vector<2x256xf32>
    %73 = tpu.matmul %72, %2, %cst_22 {dimension_numbers = #tpu.dot_dimension_numbers<[1], [0], [0], [1], [0, 0, 1, 1], [], []>} : vector<2x64xf32>, vector<64x256xf32>, vector<2x256xf32> -> vector<2x256xf32>
    %74 = arith.addf %73, %5 : vector<2x256xf32>
    %75 = vector.extract_strided_slice %72 {offsets = [0, 0], sizes = [1, 64], strides = [1, 1]} : vector<2x64xf32> to vector<1x64xf32>
    %76 = vector.shape_cast %75 : vector<1x64xf32> to vector<64xf32>
    %c0_23 = arith.constant 0 : index
    %c0_24 = arith.constant 0 : index
    %77 = vector.load %arg10[%c0_23, %c0_24] : memref<16x64xf32, #tpu.memory_space<vmem>>, vector<1x64xf32>
    %78 = vector.shape_cast %77 : vector<1x64xf32> to vector<64xf32>
    %79 = vector.shape_cast %76 : vector<64xf32> to vector<1x64xf32>
    tpu.vector_store %arg10[%c0_23, %c0_24], %79 {strides = array<i32>} : memref<16x64xf32, #tpu.memory_space<vmem>>, vector<1x64xf32>,
    %80 = vector.extract_strided_slice %72 {offsets = [1, 0], sizes = [1, 64], strides = [1, 1]} : vector<2x64xf32> to vector<1x64xf32>
    %81 = vector.shape_cast %80 : vector<1x64xf32> to vector<64xf32>
    %c8 = arith.constant 8 : index
    %c0_25 = arith.constant 0 : index
    %82 = vector.load %arg10[%c8, %c0_25] : memref<16x64xf32, #tpu.memory_space<vmem>>, vector<1x64xf32>
    %83 = vector.shape_cast %82 : vector<1x64xf32> to vector<64xf32>
    %84 = vector.shape_cast %81 : vector<64xf32> to vector<1x64xf32>
    tpu.vector_store %arg10[%c8, %c0_25], %84 {strides = array<i32>} : memref<16x64xf32, #tpu.memory_space<vmem>>, vector<1x64xf32>,
    %cst_26 = arith.constant dense<0.000000e+00> : vector<2x128xf32>
    %85 = tpu.matmul %55, %0, %cst_26 {dimension_numbers = #tpu.dot_dimension_numbers<[1], [0], [0], [1], [0, 0, 1, 1], [], []>} : vector<2x32xf32>, vector<32x128xf32>, vector<2x128xf32> -> vector<2x128xf32>
    %86 = arith.addf %17, %85 : vector<2x128xf32>
    %87 = math.tanh %86 : vector<2x128xf32>
    %88 = vector.extract_strided_slice %87 {offsets = [0, 0], sizes = [2, 96], strides = [1, 1]} : vector<2x128xf32> to vector<2x96xf32>
    %cst_27 = arith.constant 5.000000e-01 : f32
    %89 = vector.broadcast %cst_27 : f32 to vector<2x96xf32>
    %90 = arith.mulf %89, %88 : vector<2x96xf32>
    %cst_28 = arith.constant 5.000000e-01 : f32
    %91 = vector.broadcast %cst_28 : f32 to vector<2x96xf32>
    %92 = arith.addf %90, %91 : vector<2x96xf32>
    %93 = vector.extract_strided_slice %92 {offsets = [0, 0], sizes = [2, 32], strides = [1, 1]} : vector<2x96xf32> to vector<2x32xf32>
    %94 = vector.extract_strided_slice %92 {offsets = [0, 32], sizes = [2, 32], strides = [1, 1]} : vector<2x96xf32> to vector<2x32xf32>
    %95 = vector.extract_strided_slice %92 {offsets = [0, 64], sizes = [2, 32], strides = [1, 1]} : vector<2x96xf32> to vector<2x32xf32>
    %96 = vector.extract_strided_slice %87 {offsets = [0, 96], sizes = [2, 32], strides = [1, 1]} : vector<2x128xf32> to vector<2x32xf32>
    %97 = arith.mulf %94, %53 : vector<2x32xf32>
    %98 = arith.mulf %93, %96 : vector<2x32xf32>
    %99 = arith.addf %97, %98 : vector<2x32xf32>
    %100 = math.tanh %99 : vector<2x32xf32>
    %101 = arith.mulf %95, %100 : vector<2x32xf32>
    %cst_29 = arith.constant dense<0.000000e+00> : vector<2x256xf32>
    %102 = tpu.matmul %101, %1, %cst_29 {dimension_numbers = #tpu.dot_dimension_numbers<[1], [0], [0], [1], [0, 0, 1, 1], [], []>} : vector<2x32xf32>, vector<32x256xf32>, vector<2x256xf32> -> vector<2x256xf32>
    %103 = arith.addf %74, %102 : vector<2x256xf32>
    %104 = math.tanh %103 : vector<2x256xf32>
    %105 = vector.extract_strided_slice %104 {offsets = [0, 0], sizes = [2, 192], strides = [1, 1]} : vector<2x256xf32> to vector<2x192xf32>
    %cst_30 = arith.constant 5.000000e-01 : f32
    %106 = vector.broadcast %cst_30 : f32 to vector<2x192xf32>
    %107 = arith.mulf %106, %105 : vector<2x192xf32>
    %cst_31 = arith.constant 5.000000e-01 : f32
    %108 = vector.broadcast %cst_31 : f32 to vector<2x192xf32>
    %109 = arith.addf %107, %108 : vector<2x192xf32>
    %110 = vector.extract_strided_slice %109 {offsets = [0, 0], sizes = [2, 64], strides = [1, 1]} : vector<2x192xf32> to vector<2x64xf32>
    %111 = vector.extract_strided_slice %109 {offsets = [0, 64], sizes = [2, 64], strides = [1, 1]} : vector<2x192xf32> to vector<2x64xf32>
    %112 = vector.extract_strided_slice %109 {offsets = [0, 128], sizes = [2, 64], strides = [1, 1]} : vector<2x192xf32> to vector<2x64xf32>
    %113 = vector.extract_strided_slice %104 {offsets = [0, 192], sizes = [2, 64], strides = [1, 1]} : vector<2x256xf32> to vector<2x64xf32>
    %114 = arith.mulf %111, %70 : vector<2x64xf32>
    %115 = arith.mulf %110, %113 : vector<2x64xf32>
    %116 = arith.addf %114, %115 : vector<2x64xf32>
    %117 = math.tanh %116 : vector<2x64xf32>
    %118 = arith.mulf %112, %117 : vector<2x64xf32>
    %cst_32 = arith.constant dense<0.000000e+00> : vector<2x256xf32>
    %119 = tpu.matmul %118, %2, %cst_32 {dimension_numbers = #tpu.dot_dimension_numbers<[1], [0], [0], [1], [0, 0, 1, 1], [], []>} : vector<2x64xf32>, vector<64x256xf32>, vector<2x256xf32> -> vector<2x256xf32>
    %120 = arith.addf %119, %5 : vector<2x256xf32>
    %121 = vector.extract_strided_slice %118 {offsets = [0, 0], sizes = [1, 64], strides = [1, 1]} : vector<2x64xf32> to vector<1x64xf32>
    %122 = vector.shape_cast %121 : vector<1x64xf32> to vector<64xf32>
    %c1 = arith.constant 1 : index
    %c0_33 = arith.constant 0 : index
    %123 = vector.load %arg10[%c1, %c0_33] : memref<16x64xf32, #tpu.memory_space<vmem>>, vector<1x64xf32>
    %124 = vector.shape_cast %123 : vector<1x64xf32> to vector<64xf32>
    %125 = vector.shape_cast %122 : vector<64xf32> to vector<1x64xf32>
    tpu.vector_store %arg10[%c1, %c0_33], %125 {strides = array<i32>} : memref<16x64xf32, #tpu.memory_space<vmem>>, vector<1x64xf32>,
    %126 = vector.extract_strided_slice %118 {offsets = [1, 0], sizes = [1, 64], strides = [1, 1]} : vector<2x64xf32> to vector<1x64xf32>
    %127 = vector.shape_cast %126 : vector<1x64xf32> to vector<64xf32>
    %c9 = arith.constant 9 : index
    %c0_34 = arith.constant 0 : index
    %128 = vector.load %arg10[%c9, %c0_34] : memref<16x64xf32, #tpu.memory_space<vmem>>, vector<1x64xf32>
    %129 = vector.shape_cast %128 : vector<1x64xf32> to vector<64xf32>
    %130 = vector.shape_cast %127 : vector<64xf32> to vector<1x64xf32>
    tpu.vector_store %arg10[%c9, %c0_34], %130 {strides = array<i32>} : memref<16x64xf32, #tpu.memory_space<vmem>>, vector<1x64xf32>,
    %cst_35 = arith.constant dense<0.000000e+00> : vector<2x128xf32>
    %131 = tpu.matmul %101, %0, %cst_35 {dimension_numbers = #tpu.dot_dimension_numbers<[1], [0], [0], [1], [0, 0, 1, 1], [], []>} : vector<2x32xf32>, vector<32x128xf32>, vector<2x128xf32> -> vector<2x128xf32>
    %132 = arith.addf %20, %131 : vector<2x128xf32>
    %133 = math.tanh %132 : vector<2x128xf32>
    %134 = vector.extract_strided_slice %133 {offsets = [0, 0], sizes = [2, 96], strides = [1, 1]} : vector<2x128xf32> to vector<2x96xf32>
    %cst_36 = arith.constant 5.000000e-01 : f32
    %135 = vector.broadcast %cst_36 : f32 to vector<2x96xf32>
    %136 = arith.mulf %135, %134 : vector<2x96xf32>
    %cst_37 = arith.constant 5.000000e-01 : f32
    %137 = vector.broadcast %cst_37 : f32 to vector<2x96xf32>
    %138 = arith.addf %136, %137 : vector<2x96xf32>
    %139 = vector.extract_strided_slice %138 {offsets = [0, 0], sizes = [2, 32], strides = [1, 1]} : vector<2x96xf32> to vector<2x32xf32>
    %140 = vector.extract_strided_slice %138 {offsets = [0, 32], sizes = [2, 32], strides = [1, 1]} : vector<2x96xf32> to vector<2x32xf32>
    %141 = vector.extract_strided_slice %138 {offsets = [0, 64], sizes = [2, 32], strides = [1, 1]} : vector<2x96xf32> to vector<2x32xf32>
    %142 = vector.extract_strided_slice %133 {offsets = [0, 96], sizes = [2, 32], strides = [1, 1]} : vector<2x128xf32> to vector<2x32xf32>
    %143 = arith.mulf %140, %99 : vector<2x32xf32>
    %144 = arith.mulf %139, %142 : vector<2x32xf32>
    %145 = arith.addf %143, %144 : vector<2x32xf32>
    %146 = math.tanh %145 : vector<2x32xf32>
    %147 = arith.mulf %141, %146 : vector<2x32xf32>
    %cst_38 = arith.constant dense<0.000000e+00> : vector<2x256xf32>
    %148 = tpu.matmul %147, %1, %cst_38 {dimension_numbers = #tpu.dot_dimension_numbers<[1], [0], [0], [1], [0, 0, 1, 1], [], []>} : vector<2x32xf32>, vector<32x256xf32>, vector<2x256xf32> -> vector<2x256xf32>
    %149 = arith.addf %120, %148 : vector<2x256xf32>
    %150 = math.tanh %149 : vector<2x256xf32>
    %151 = vector.extract_strided_slice %150 {offsets = [0, 0], sizes = [2, 192], strides = [1, 1]} : vector<2x256xf32> to vector<2x192xf32>
    %cst_39 = arith.constant 5.000000e-01 : f32
    %152 = vector.broadcast %cst_39 : f32 to vector<2x192xf32>
    %153 = arith.mulf %152, %151 : vector<2x192xf32>
    %cst_40 = arith.constant 5.000000e-01 : f32
    %154 = vector.broadcast %cst_40 : f32 to vector<2x192xf32>
    %155 = arith.addf %153, %154 : vector<2x192xf32>
    %156 = vector.extract_strided_slice %155 {offsets = [0, 0], sizes = [2, 64], strides = [1, 1]} : vector<2x192xf32> to vector<2x64xf32>
    %157 = vector.extract_strided_slice %155 {offsets = [0, 64], sizes = [2, 64], strides = [1, 1]} : vector<2x192xf32> to vector<2x64xf32>
    %158 = vector.extract_strided_slice %155 {offsets = [0, 128], sizes = [2, 64], strides = [1, 1]} : vector<2x192xf32> to vector<2x64xf32>
    %159 = vector.extract_strided_slice %150 {offsets = [0, 192], sizes = [2, 64], strides = [1, 1]} : vector<2x256xf32> to vector<2x64xf32>
    %160 = arith.mulf %157, %116 : vector<2x64xf32>
    %161 = arith.mulf %156, %159 : vector<2x64xf32>
    %162 = arith.addf %160, %161 : vector<2x64xf32>
    %163 = math.tanh %162 : vector<2x64xf32>
    %164 = arith.mulf %158, %163 : vector<2x64xf32>
    %cst_41 = arith.constant dense<0.000000e+00> : vector<2x256xf32>
    %165 = tpu.matmul %164, %2, %cst_41 {dimension_numbers = #tpu.dot_dimension_numbers<[1], [0], [0], [1], [0, 0, 1, 1], [], []>} : vector<2x64xf32>, vector<64x256xf32>, vector<2x256xf32> -> vector<2x256xf32>
    %166 = arith.addf %165, %5 : vector<2x256xf32>
    %167 = vector.extract_strided_slice %164 {offsets = [0, 0], sizes = [1, 64], strides = [1, 1]} : vector<2x64xf32> to vector<1x64xf32>
    %168 = vector.shape_cast %167 : vector<1x64xf32> to vector<64xf32>
    %c2 = arith.constant 2 : index
    %c0_42 = arith.constant 0 : index
    %169 = vector.load %arg10[%c2, %c0_42] : memref<16x64xf32, #tpu.memory_space<vmem>>, vector<1x64xf32>
    %170 = vector.shape_cast %169 : vector<1x64xf32> to vector<64xf32>
    %171 = vector.shape_cast %168 : vector<64xf32> to vector<1x64xf32>
    tpu.vector_store %arg10[%c2, %c0_42], %171 {strides = array<i32>} : memref<16x64xf32, #tpu.memory_space<vmem>>, vector<1x64xf32>,
    %172 = vector.extract_strided_slice %164 {offsets = [1, 0], sizes = [1, 64], strides = [1, 1]} : vector<2x64xf32> to vector<1x64xf32>
    %173 = vector.shape_cast %172 : vector<1x64xf32> to vector<64xf32>
    %c10 = arith.constant 10 : index
    %c0_43 = arith.constant 0 : index
    %174 = vector.load %arg10[%c10, %c0_43] : memref<16x64xf32, #tpu.memory_space<vmem>>, vector<1x64xf32>
    %175 = vector.shape_cast %174 : vector<1x64xf32> to vector<64xf32>
    %176 = vector.shape_cast %173 : vector<64xf32> to vector<1x64xf32>
    tpu.vector_store %arg10[%c10, %c0_43], %176 {strides = array<i32>} : memref<16x64xf32, #tpu.memory_space<vmem>>, vector<1x64xf32>,
    %cst_44 = arith.constant dense<0.000000e+00> : vector<2x128xf32>
    %177 = tpu.matmul %147, %0, %cst_44 {dimension_numbers = #tpu.dot_dimension_numbers<[1], [0], [0], [1], [0, 0, 1, 1], [], []>} : vector<2x32xf32>, vector<32x128xf32>, vector<2x128xf32> -> vector<2x128xf32>
    %178 = arith.addf %23, %177 : vector<2x128xf32>
    %179 = math.tanh %178 : vector<2x128xf32>
    %180 = vector.extract_strided_slice %179 {offsets = [0, 0], sizes = [2, 96], strides = [1, 1]} : vector<2x128xf32> to vector<2x96xf32>
    %cst_45 = arith.constant 5.000000e-01 : f32
    %181 = vector.broadcast %cst_45 : f32 to vector<2x96xf32>
    %182 = arith.mulf %181, %180 : vector<2x96xf32>
    %cst_46 = arith.constant 5.000000e-01 : f32
    %183 = vector.broadcast %cst_46 : f32 to vector<2x96xf32>
    %184 = arith.addf %182, %183 : vector<2x96xf32>
    %185 = vector.extract_strided_slice %184 {offsets = [0, 0], sizes = [2, 32], strides = [1, 1]} : vector<2x96xf32> to vector<2x32xf32>
    %186 = vector.extract_strided_slice %184 {offsets = [0, 32], sizes = [2, 32], strides = [1, 1]} : vector<2x96xf32> to vector<2x32xf32>
    %187 = vector.extract_strided_slice %184 {offsets = [0, 64], sizes = [2, 32], strides = [1, 1]} : vector<2x96xf32> to vector<2x32xf32>
    %188 = vector.extract_strided_slice %179 {offsets = [0, 96], sizes = [2, 32], strides = [1, 1]} : vector<2x128xf32> to vector<2x32xf32>
    %189 = arith.mulf %186, %145 : vector<2x32xf32>
    %190 = arith.mulf %185, %188 : vector<2x32xf32>
    %191 = arith.addf %189, %190 : vector<2x32xf32>
    %192 = math.tanh %191 : vector<2x32xf32>
    %193 = arith.mulf %187, %192 : vector<2x32xf32>
    %cst_47 = arith.constant dense<0.000000e+00> : vector<2x256xf32>
    %194 = tpu.matmul %193, %1, %cst_47 {dimension_numbers = #tpu.dot_dimension_numbers<[1], [0], [0], [1], [0, 0, 1, 1], [], []>} : vector<2x32xf32>, vector<32x256xf32>, vector<2x256xf32> -> vector<2x256xf32>
    %195 = arith.addf %166, %194 : vector<2x256xf32>
    %196 = math.tanh %195 : vector<2x256xf32>
    %197 = vector.extract_strided_slice %196 {offsets = [0, 0], sizes = [2, 192], strides = [1, 1]} : vector<2x256xf32> to vector<2x192xf32>
    %cst_48 = arith.constant 5.000000e-01 : f32
    %198 = vector.broadcast %cst_48 : f32 to vector<2x192xf32>
    %199 = arith.mulf %198, %197 : vector<2x192xf32>
    %cst_49 = arith.constant 5.000000e-01 : f32
    %200 = vector.broadcast %cst_49 : f32 to vector<2x192xf32>
    %201 = arith.addf %199, %200 : vector<2x192xf32>
    %202 = vector.extract_strided_slice %201 {offsets = [0, 0], sizes = [2, 64], strides = [1, 1]} : vector<2x192xf32> to vector<2x64xf32>
    %203 = vector.extract_strided_slice %201 {offsets = [0, 64], sizes = [2, 64], strides = [1, 1]} : vector<2x192xf32> to vector<2x64xf32>
    %204 = vector.extract_strided_slice %201 {offsets = [0, 128], sizes = [2, 64], strides = [1, 1]} : vector<2x192xf32> to vector<2x64xf32>
    %205 = vector.extract_strided_slice %196 {offsets = [0, 192], sizes = [2, 64], strides = [1, 1]} : vector<2x256xf32> to vector<2x64xf32>
    %206 = arith.mulf %203, %162 : vector<2x64xf32>
    %207 = arith.mulf %202, %205 : vector<2x64xf32>
    %208 = arith.addf %206, %207 : vector<2x64xf32>
    %209 = math.tanh %208 : vector<2x64xf32>
    %210 = arith.mulf %204, %209 : vector<2x64xf32>
    %cst_50 = arith.constant dense<0.000000e+00> : vector<2x256xf32>
    %211 = tpu.matmul %210, %2, %cst_50 {dimension_numbers = #tpu.dot_dimension_numbers<[1], [0], [0], [1], [0, 0, 1, 1], [], []>} : vector<2x64xf32>, vector<64x256xf32>, vector<2x256xf32> -> vector<2x256xf32>
    %212 = arith.addf %211, %5 : vector<2x256xf32>
    %213 = vector.extract_strided_slice %210 {offsets = [0, 0], sizes = [1, 64], strides = [1, 1]} : vector<2x64xf32> to vector<1x64xf32>
    %214 = vector.shape_cast %213 : vector<1x64xf32> to vector<64xf32>
    %c3 = arith.constant 3 : index
    %c0_51 = arith.constant 0 : index
    %215 = vector.load %arg10[%c3, %c0_51] : memref<16x64xf32, #tpu.memory_space<vmem>>, vector<1x64xf32>
    %216 = vector.shape_cast %215 : vector<1x64xf32> to vector<64xf32>
    %217 = vector.shape_cast %214 : vector<64xf32> to vector<1x64xf32>
    tpu.vector_store %arg10[%c3, %c0_51], %217 {strides = array<i32>} : memref<16x64xf32, #tpu.memory_space<vmem>>, vector<1x64xf32>,
    %218 = vector.extract_strided_slice %210 {offsets = [1, 0], sizes = [1, 64], strides = [1, 1]} : vector<2x64xf32> to vector<1x64xf32>
    %219 = vector.shape_cast %218 : vector<1x64xf32> to vector<64xf32>
    %c11 = arith.constant 11 : index
    %c0_52 = arith.constant 0 : index
    %220 = vector.load %arg10[%c11, %c0_52] : memref<16x64xf32, #tpu.memory_space<vmem>>, vector<1x64xf32>
    %221 = vector.shape_cast %220 : vector<1x64xf32> to vector<64xf32>
    %222 = vector.shape_cast %219 : vector<64xf32> to vector<1x64xf32>
    tpu.vector_store %arg10[%c11, %c0_52], %222 {strides = array<i32>} : memref<16x64xf32, #tpu.memory_space<vmem>>, vector<1x64xf32>,
    %cst_53 = arith.constant dense<0.000000e+00> : vector<2x128xf32>
    %223 = tpu.matmul %193, %0, %cst_53 {dimension_numbers = #tpu.dot_dimension_numbers<[1], [0], [0], [1], [0, 0, 1, 1], [], []>} : vector<2x32xf32>, vector<32x128xf32>, vector<2x128xf32> -> vector<2x128xf32>
    %224 = arith.addf %26, %223 : vector<2x128xf32>
    %225 = math.tanh %224 : vector<2x128xf32>
    %226 = vector.extract_strided_slice %225 {offsets = [0, 0], sizes = [2, 96], strides = [1, 1]} : vector<2x128xf32> to vector<2x96xf32>
    %cst_54 = arith.constant 5.000000e-01 : f32
    %227 = vector.broadcast %cst_54 : f32 to vector<2x96xf32>
    %228 = arith.mulf %227, %226 : vector<2x96xf32>
    %cst_55 = arith.constant 5.000000e-01 : f32
    %229 = vector.broadcast %cst_55 : f32 to vector<2x96xf32>
    %230 = arith.addf %228, %229 : vector<2x96xf32>
    %231 = vector.extract_strided_slice %230 {offsets = [0, 0], sizes = [2, 32], strides = [1, 1]} : vector<2x96xf32> to vector<2x32xf32>
    %232 = vector.extract_strided_slice %230 {offsets = [0, 32], sizes = [2, 32], strides = [1, 1]} : vector<2x96xf32> to vector<2x32xf32>
    %233 = vector.extract_strided_slice %230 {offsets = [0, 64], sizes = [2, 32], strides = [1, 1]} : vector<2x96xf32> to vector<2x32xf32>
    %234 = vector.extract_strided_slice %225 {offsets = [0, 96], sizes = [2, 32], strides = [1, 1]} : vector<2x128xf32> to vector<2x32xf32>
    %235 = arith.mulf %232, %191 : vector<2x32xf32>
    %236 = arith.mulf %231, %234 : vector<2x32xf32>
    %237 = arith.addf %235, %236 : vector<2x32xf32>
    %238 = math.tanh %237 : vector<2x32xf32>
    %239 = arith.mulf %233, %238 : vector<2x32xf32>
    %cst_56 = arith.constant dense<0.000000e+00> : vector<2x256xf32>
    %240 = tpu.matmul %239, %1, %cst_56 {dimension_numbers = #tpu.dot_dimension_numbers<[1], [0], [0], [1], [0, 0, 1, 1], [], []>} : vector<2x32xf32>, vector<32x256xf32>, vector<2x256xf32> -> vector<2x256xf32>
    %241 = arith.addf %212, %240 : vector<2x256xf32>
    %242 = math.tanh %241 : vector<2x256xf32>
    %243 = vector.extract_strided_slice %242 {offsets = [0, 0], sizes = [2, 192], strides = [1, 1]} : vector<2x256xf32> to vector<2x192xf32>
    %cst_57 = arith.constant 5.000000e-01 : f32
    %244 = vector.broadcast %cst_57 : f32 to vector<2x192xf32>
    %245 = arith.mulf %244, %243 : vector<2x192xf32>
    %cst_58 = arith.constant 5.000000e-01 : f32
    %246 = vector.broadcast %cst_58 : f32 to vector<2x192xf32>
    %247 = arith.addf %245, %246 : vector<2x192xf32>
    %248 = vector.extract_strided_slice %247 {offsets = [0, 0], sizes = [2, 64], strides = [1, 1]} : vector<2x192xf32> to vector<2x64xf32>
    %249 = vector.extract_strided_slice %247 {offsets = [0, 64], sizes = [2, 64], strides = [1, 1]} : vector<2x192xf32> to vector<2x64xf32>
    %250 = vector.extract_strided_slice %247 {offsets = [0, 128], sizes = [2, 64], strides = [1, 1]} : vector<2x192xf32> to vector<2x64xf32>
    %251 = vector.extract_strided_slice %242 {offsets = [0, 192], sizes = [2, 64], strides = [1, 1]} : vector<2x256xf32> to vector<2x64xf32>
    %252 = arith.mulf %249, %208 : vector<2x64xf32>
    %253 = arith.mulf %248, %251 : vector<2x64xf32>
    %254 = arith.addf %252, %253 : vector<2x64xf32>
    %255 = math.tanh %254 : vector<2x64xf32>
    %256 = arith.mulf %250, %255 : vector<2x64xf32>
    %cst_59 = arith.constant dense<0.000000e+00> : vector<2x256xf32>
    %257 = tpu.matmul %256, %2, %cst_59 {dimension_numbers = #tpu.dot_dimension_numbers<[1], [0], [0], [1], [0, 0, 1, 1], [], []>} : vector<2x64xf32>, vector<64x256xf32>, vector<2x256xf32> -> vector<2x256xf32>
    %258 = arith.addf %257, %5 : vector<2x256xf32>
    %259 = vector.extract_strided_slice %256 {offsets = [0, 0], sizes = [1, 64], strides = [1, 1]} : vector<2x64xf32> to vector<1x64xf32>
    %260 = vector.shape_cast %259 : vector<1x64xf32> to vector<64xf32>
    %c4 = arith.constant 4 : index
    %c0_60 = arith.constant 0 : index
    %261 = vector.load %arg10[%c4, %c0_60] : memref<16x64xf32, #tpu.memory_space<vmem>>, vector<1x64xf32>
    %262 = vector.shape_cast %261 : vector<1x64xf32> to vector<64xf32>
    %263 = vector.shape_cast %260 : vector<64xf32> to vector<1x64xf32>
    tpu.vector_store %arg10[%c4, %c0_60], %263 {strides = array<i32>} : memref<16x64xf32, #tpu.memory_space<vmem>>, vector<1x64xf32>,
    %264 = vector.extract_strided_slice %256 {offsets = [1, 0], sizes = [1, 64], strides = [1, 1]} : vector<2x64xf32> to vector<1x64xf32>
    %265 = vector.shape_cast %264 : vector<1x64xf32> to vector<64xf32>
    %c12 = arith.constant 12 : index
    %c0_61 = arith.constant 0 : index
    %266 = vector.load %arg10[%c12, %c0_61] : memref<16x64xf32, #tpu.memory_space<vmem>>, vector<1x64xf32>
    %267 = vector.shape_cast %266 : vector<1x64xf32> to vector<64xf32>
    %268 = vector.shape_cast %265 : vector<64xf32> to vector<1x64xf32>
    tpu.vector_store %arg10[%c12, %c0_61], %268 {strides = array<i32>} : memref<16x64xf32, #tpu.memory_space<vmem>>, vector<1x64xf32>,
    %cst_62 = arith.constant dense<0.000000e+00> : vector<2x128xf32>
    %269 = tpu.matmul %239, %0, %cst_62 {dimension_numbers = #tpu.dot_dimension_numbers<[1], [0], [0], [1], [0, 0, 1, 1], [], []>} : vector<2x32xf32>, vector<32x128xf32>, vector<2x128xf32> -> vector<2x128xf32>
    %270 = arith.addf %29, %269 : vector<2x128xf32>
    %271 = math.tanh %270 : vector<2x128xf32>
    %272 = vector.extract_strided_slice %271 {offsets = [0, 0], sizes = [2, 96], strides = [1, 1]} : vector<2x128xf32> to vector<2x96xf32>
    %cst_63 = arith.constant 5.000000e-01 : f32
    %273 = vector.broadcast %cst_63 : f32 to vector<2x96xf32>
    %274 = arith.mulf %273, %272 : vector<2x96xf32>
    %cst_64 = arith.constant 5.000000e-01 : f32
    %275 = vector.broadcast %cst_64 : f32 to vector<2x96xf32>
    %276 = arith.addf %274, %275 : vector<2x96xf32>
    %277 = vector.extract_strided_slice %276 {offsets = [0, 0], sizes = [2, 32], strides = [1, 1]} : vector<2x96xf32> to vector<2x32xf32>
    %278 = vector.extract_strided_slice %276 {offsets = [0, 32], sizes = [2, 32], strides = [1, 1]} : vector<2x96xf32> to vector<2x32xf32>
    %279 = vector.extract_strided_slice %276 {offsets = [0, 64], sizes = [2, 32], strides = [1, 1]} : vector<2x96xf32> to vector<2x32xf32>
    %280 = vector.extract_strided_slice %271 {offsets = [0, 96], sizes = [2, 32], strides = [1, 1]} : vector<2x128xf32> to vector<2x32xf32>
    %281 = arith.mulf %278, %237 : vector<2x32xf32>
    %282 = arith.mulf %277, %280 : vector<2x32xf32>
    %283 = arith.addf %281, %282 : vector<2x32xf32>
    %284 = math.tanh %283 : vector<2x32xf32>
    %285 = arith.mulf %279, %284 : vector<2x32xf32>
    %cst_65 = arith.constant dense<0.000000e+00> : vector<2x256xf32>
    %286 = tpu.matmul %285, %1, %cst_65 {dimension_numbers = #tpu.dot_dimension_numbers<[1], [0], [0], [1], [0, 0, 1, 1], [], []>} : vector<2x32xf32>, vector<32x256xf32>, vector<2x256xf32> -> vector<2x256xf32>
    %287 = arith.addf %258, %286 : vector<2x256xf32>
    %288 = math.tanh %287 : vector<2x256xf32>
    %289 = vector.extract_strided_slice %288 {offsets = [0, 0], sizes = [2, 192], strides = [1, 1]} : vector<2x256xf32> to vector<2x192xf32>
    %cst_66 = arith.constant 5.000000e-01 : f32
    %290 = vector.broadcast %cst_66 : f32 to vector<2x192xf32>
    %291 = arith.mulf %290, %289 : vector<2x192xf32>
    %cst_67 = arith.constant 5.000000e-01 : f32
    %292 = vector.broadcast %cst_67 : f32 to vector<2x192xf32>
    %293 = arith.addf %291, %292 : vector<2x192xf32>
    %294 = vector.extract_strided_slice %293 {offsets = [0, 0], sizes = [2, 64], strides = [1, 1]} : vector<2x192xf32> to vector<2x64xf32>
    %295 = vector.extract_strided_slice %293 {offsets = [0, 64], sizes = [2, 64], strides = [1, 1]} : vector<2x192xf32> to vector<2x64xf32>
    %296 = vector.extract_strided_slice %293 {offsets = [0, 128], sizes = [2, 64], strides = [1, 1]} : vector<2x192xf32> to vector<2x64xf32>
    %297 = vector.extract_strided_slice %288 {offsets = [0, 192], sizes = [2, 64], strides = [1, 1]} : vector<2x256xf32> to vector<2x64xf32>
    %298 = arith.mulf %295, %254 : vector<2x64xf32>
    %299 = arith.mulf %294, %297 : vector<2x64xf32>
    %300 = arith.addf %298, %299 : vector<2x64xf32>
    %301 = math.tanh %300 : vector<2x64xf32>
    %302 = arith.mulf %296, %301 : vector<2x64xf32>
    %cst_68 = arith.constant dense<0.000000e+00> : vector<2x256xf32>
    %303 = tpu.matmul %302, %2, %cst_68 {dimension_numbers = #tpu.dot_dimension_numbers<[1], [0], [0], [1], [0, 0, 1, 1], [], []>} : vector<2x64xf32>, vector<64x256xf32>, vector<2x256xf32> -> vector<2x256xf32>
    %304 = arith.addf %303, %5 : vector<2x256xf32>
    %305 = vector.extract_strided_slice %302 {offsets = [0, 0], sizes = [1, 64], strides = [1, 1]} : vector<2x64xf32> to vector<1x64xf32>
    %306 = vector.shape_cast %305 : vector<1x64xf32> to vector<64xf32>
    %c5 = arith.constant 5 : index
    %c0_69 = arith.constant 0 : index
    %307 = vector.load %arg10[%c5, %c0_69] : memref<16x64xf32, #tpu.memory_space<vmem>>, vector<1x64xf32>
    %308 = vector.shape_cast %307 : vector<1x64xf32> to vector<64xf32>
    %309 = vector.shape_cast %306 : vector<64xf32> to vector<1x64xf32>
    tpu.vector_store %arg10[%c5, %c0_69], %309 {strides = array<i32>} : memref<16x64xf32, #tpu.memory_space<vmem>>, vector<1x64xf32>,
    %310 = vector.extract_strided_slice %302 {offsets = [1, 0], sizes = [1, 64], strides = [1, 1]} : vector<2x64xf32> to vector<1x64xf32>
    %311 = vector.shape_cast %310 : vector<1x64xf32> to vector<64xf32>
    %c13 = arith.constant 13 : index
    %c0_70 = arith.constant 0 : index
    %312 = vector.load %arg10[%c13, %c0_70] : memref<16x64xf32, #tpu.memory_space<vmem>>, vector<1x64xf32>
    %313 = vector.shape_cast %312 : vector<1x64xf32> to vector<64xf32>
    %314 = vector.shape_cast %311 : vector<64xf32> to vector<1x64xf32>
    tpu.vector_store %arg10[%c13, %c0_70], %314 {strides = array<i32>} : memref<16x64xf32, #tpu.memory_space<vmem>>, vector<1x64xf32>,
    %cst_71 = arith.constant dense<0.000000e+00> : vector<2x128xf32>
    %315 = tpu.matmul %285, %0, %cst_71 {dimension_numbers = #tpu.dot_dimension_numbers<[1], [0], [0], [1], [0, 0, 1, 1], [], []>} : vector<2x32xf32>, vector<32x128xf32>, vector<2x128xf32> -> vector<2x128xf32>
    %316 = arith.addf %32, %315 : vector<2x128xf32>
    %317 = math.tanh %316 : vector<2x128xf32>
    %318 = vector.extract_strided_slice %317 {offsets = [0, 0], sizes = [2, 96], strides = [1, 1]} : vector<2x128xf32> to vector<2x96xf32>
    %cst_72 = arith.constant 5.000000e-01 : f32
    %319 = vector.broadcast %cst_72 : f32 to vector<2x96xf32>
    %320 = arith.mulf %319, %318 : vector<2x96xf32>
    %cst_73 = arith.constant 5.000000e-01 : f32
    %321 = vector.broadcast %cst_73 : f32 to vector<2x96xf32>
    %322 = arith.addf %320, %321 : vector<2x96xf32>
    %323 = vector.extract_strided_slice %322 {offsets = [0, 0], sizes = [2, 32], strides = [1, 1]} : vector<2x96xf32> to vector<2x32xf32>
    %324 = vector.extract_strided_slice %322 {offsets = [0, 32], sizes = [2, 32], strides = [1, 1]} : vector<2x96xf32> to vector<2x32xf32>
    %325 = vector.extract_strided_slice %322 {offsets = [0, 64], sizes = [2, 32], strides = [1, 1]} : vector<2x96xf32> to vector<2x32xf32>
    %326 = vector.extract_strided_slice %317 {offsets = [0, 96], sizes = [2, 32], strides = [1, 1]} : vector<2x128xf32> to vector<2x32xf32>
    %327 = arith.mulf %324, %283 : vector<2x32xf32>
    %328 = arith.mulf %323, %326 : vector<2x32xf32>
    %329 = arith.addf %327, %328 : vector<2x32xf32>
    %330 = math.tanh %329 : vector<2x32xf32>
    %331 = arith.mulf %325, %330 : vector<2x32xf32>
    %cst_74 = arith.constant dense<0.000000e+00> : vector<2x256xf32>
    %332 = tpu.matmul %331, %1, %cst_74 {dimension_numbers = #tpu.dot_dimension_numbers<[1], [0], [0], [1], [0, 0, 1, 1], [], []>} : vector<2x32xf32>, vector<32x256xf32>, vector<2x256xf32> -> vector<2x256xf32>
    %333 = arith.addf %304, %332 : vector<2x256xf32>
    %334 = math.tanh %333 : vector<2x256xf32>
    %335 = vector.extract_strided_slice %334 {offsets = [0, 0], sizes = [2, 192], strides = [1, 1]} : vector<2x256xf32> to vector<2x192xf32>
    %cst_75 = arith.constant 5.000000e-01 : f32
    %336 = vector.broadcast %cst_75 : f32 to vector<2x192xf32>
    %337 = arith.mulf %336, %335 : vector<2x192xf32>
    %cst_76 = arith.constant 5.000000e-01 : f32
    %338 = vector.broadcast %cst_76 : f32 to vector<2x192xf32>
    %339 = arith.addf %337, %338 : vector<2x192xf32>
    %340 = vector.extract_strided_slice %339 {offsets = [0, 0], sizes = [2, 64], strides = [1, 1]} : vector<2x192xf32> to vector<2x64xf32>
    %341 = vector.extract_strided_slice %339 {offsets = [0, 64], sizes = [2, 64], strides = [1, 1]} : vector<2x192xf32> to vector<2x64xf32>
    %342 = vector.extract_strided_slice %339 {offsets = [0, 128], sizes = [2, 64], strides = [1, 1]} : vector<2x192xf32> to vector<2x64xf32>
    %343 = vector.extract_strided_slice %334 {offsets = [0, 192], sizes = [2, 64], strides = [1, 1]} : vector<2x256xf32> to vector<2x64xf32>
    %344 = arith.mulf %341, %300 : vector<2x64xf32>
    %345 = arith.mulf %340, %343 : vector<2x64xf32>
    %346 = arith.addf %344, %345 : vector<2x64xf32>
    %347 = math.tanh %346 : vector<2x64xf32>
    %348 = arith.mulf %342, %347 : vector<2x64xf32>
    %cst_77 = arith.constant dense<0.000000e+00> : vector<2x256xf32>
    %349 = tpu.matmul %348, %2, %cst_77 {dimension_numbers = #tpu.dot_dimension_numbers<[1], [0], [0], [1], [0, 0, 1, 1], [], []>} : vector<2x64xf32>, vector<64x256xf32>, vector<2x256xf32> -> vector<2x256xf32>
    %350 = arith.addf %349, %5 : vector<2x256xf32>
    %351 = vector.extract_strided_slice %348 {offsets = [0, 0], sizes = [1, 64], strides = [1, 1]} : vector<2x64xf32> to vector<1x64xf32>
    %352 = vector.shape_cast %351 : vector<1x64xf32> to vector<64xf32>
    %c6 = arith.constant 6 : index
    %c0_78 = arith.constant 0 : index
    %353 = vector.load %arg10[%c6, %c0_78] : memref<16x64xf32, #tpu.memory_space<vmem>>, vector<1x64xf32>
    %354 = vector.shape_cast %353 : vector<1x64xf32> to vector<64xf32>
    %355 = vector.shape_cast %352 : vector<64xf32> to vector<1x64xf32>
    tpu.vector_store %arg10[%c6, %c0_78], %355 {strides = array<i32>} : memref<16x64xf32, #tpu.memory_space<vmem>>, vector<1x64xf32>,
    %356 = vector.extract_strided_slice %348 {offsets = [1, 0], sizes = [1, 64], strides = [1, 1]} : vector<2x64xf32> to vector<1x64xf32>
    %357 = vector.shape_cast %356 : vector<1x64xf32> to vector<64xf32>
    %c14 = arith.constant 14 : index
    %c0_79 = arith.constant 0 : index
    %358 = vector.load %arg10[%c14, %c0_79] : memref<16x64xf32, #tpu.memory_space<vmem>>, vector<1x64xf32>
    %359 = vector.shape_cast %358 : vector<1x64xf32> to vector<64xf32>
    %360 = vector.shape_cast %357 : vector<64xf32> to vector<1x64xf32>
    tpu.vector_store %arg10[%c14, %c0_79], %360 {strides = array<i32>} : memref<16x64xf32, #tpu.memory_space<vmem>>, vector<1x64xf32>,
    %cst_80 = arith.constant dense<0.000000e+00> : vector<2x128xf32>
    %361 = tpu.matmul %331, %0, %cst_80 {dimension_numbers = #tpu.dot_dimension_numbers<[1], [0], [0], [1], [0, 0, 1, 1], [], []>} : vector<2x32xf32>, vector<32x128xf32>, vector<2x128xf32> -> vector<2x128xf32>
    %362 = arith.addf %35, %361 : vector<2x128xf32>
    %363 = math.tanh %362 : vector<2x128xf32>
    %364 = vector.extract_strided_slice %363 {offsets = [0, 0], sizes = [2, 96], strides = [1, 1]} : vector<2x128xf32> to vector<2x96xf32>
    %cst_81 = arith.constant 5.000000e-01 : f32
    %365 = vector.broadcast %cst_81 : f32 to vector<2x96xf32>
    %366 = arith.mulf %365, %364 : vector<2x96xf32>
    %cst_82 = arith.constant 5.000000e-01 : f32
    %367 = vector.broadcast %cst_82 : f32 to vector<2x96xf32>
    %368 = arith.addf %366, %367 : vector<2x96xf32>
    %369 = vector.extract_strided_slice %368 {offsets = [0, 0], sizes = [2, 32], strides = [1, 1]} : vector<2x96xf32> to vector<2x32xf32>
    %370 = vector.extract_strided_slice %368 {offsets = [0, 32], sizes = [2, 32], strides = [1, 1]} : vector<2x96xf32> to vector<2x32xf32>
    %371 = vector.extract_strided_slice %368 {offsets = [0, 64], sizes = [2, 32], strides = [1, 1]} : vector<2x96xf32> to vector<2x32xf32>
    %372 = vector.extract_strided_slice %363 {offsets = [0, 96], sizes = [2, 32], strides = [1, 1]} : vector<2x128xf32> to vector<2x32xf32>
    %373 = arith.mulf %370, %329 : vector<2x32xf32>
    %374 = arith.mulf %369, %372 : vector<2x32xf32>
    %375 = arith.addf %373, %374 : vector<2x32xf32>
    %376 = math.tanh %375 : vector<2x32xf32>
    %377 = arith.mulf %371, %376 : vector<2x32xf32>
    %cst_83 = arith.constant dense<0.000000e+00> : vector<2x256xf32>
    %378 = tpu.matmul %377, %1, %cst_83 {dimension_numbers = #tpu.dot_dimension_numbers<[1], [0], [0], [1], [0, 0, 1, 1], [], []>} : vector<2x32xf32>, vector<32x256xf32>, vector<2x256xf32> -> vector<2x256xf32>
    %379 = arith.addf %350, %378 : vector<2x256xf32>
    %380 = math.tanh %379 : vector<2x256xf32>
    %381 = vector.extract_strided_slice %380 {offsets = [0, 0], sizes = [2, 192], strides = [1, 1]} : vector<2x256xf32> to vector<2x192xf32>
    %cst_84 = arith.constant 5.000000e-01 : f32
    %382 = vector.broadcast %cst_84 : f32 to vector<2x192xf32>
    %383 = arith.mulf %382, %381 : vector<2x192xf32>
    %cst_85 = arith.constant 5.000000e-01 : f32
    %384 = vector.broadcast %cst_85 : f32 to vector<2x192xf32>
    %385 = arith.addf %383, %384 : vector<2x192xf32>
    %386 = vector.extract_strided_slice %385 {offsets = [0, 0], sizes = [2, 64], strides = [1, 1]} : vector<2x192xf32> to vector<2x64xf32>
    %387 = vector.extract_strided_slice %385 {offsets = [0, 64], sizes = [2, 64], strides = [1, 1]} : vector<2x192xf32> to vector<2x64xf32>
    %388 = vector.extract_strided_slice %385 {offsets = [0, 128], sizes = [2, 64], strides = [1, 1]} : vector<2x192xf32> to vector<2x64xf32>
    %389 = vector.extract_strided_slice %380 {offsets = [0, 192], sizes = [2, 64], strides = [1, 1]} : vector<2x256xf32> to vector<2x64xf32>
    %390 = arith.mulf %387, %346 : vector<2x64xf32>
    %391 = arith.mulf %386, %389 : vector<2x64xf32>
    %392 = arith.addf %390, %391 : vector<2x64xf32>
    %393 = math.tanh %392 : vector<2x64xf32>
    %394 = arith.mulf %388, %393 : vector<2x64xf32>
    %395 = vector.extract_strided_slice %394 {offsets = [0, 0], sizes = [1, 64], strides = [1, 1]} : vector<2x64xf32> to vector<1x64xf32>
    %396 = vector.shape_cast %395 : vector<1x64xf32> to vector<64xf32>
    %c7 = arith.constant 7 : index
    %c0_86 = arith.constant 0 : index
    %397 = vector.load %arg10[%c7, %c0_86] : memref<16x64xf32, #tpu.memory_space<vmem>>, vector<1x64xf32>
    %398 = vector.shape_cast %397 : vector<1x64xf32> to vector<64xf32>
    %399 = vector.shape_cast %396 : vector<64xf32> to vector<1x64xf32>
    tpu.vector_store %arg10[%c7, %c0_86], %399 {strides = array<i32>} : memref<16x64xf32, #tpu.memory_space<vmem>>, vector<1x64xf32>,
    %400 = vector.extract_strided_slice %394 {offsets = [1, 0], sizes = [1, 64], strides = [1, 1]} : vector<2x64xf32> to vector<1x64xf32>
    %401 = vector.shape_cast %400 : vector<1x64xf32> to vector<64xf32>
    %c15 = arith.constant 15 : index
    %c0_87 = arith.constant 0 : index
    %402 = vector.load %arg10[%c15, %c0_87] : memref<16x64xf32, #tpu.memory_space<vmem>>, vector<1x64xf32>
    %403 = vector.shape_cast %402 : vector<1x64xf32> to vector<64xf32>
    %404 = vector.shape_cast %401 : vector<64xf32> to vector<1x64xf32>
    tpu.vector_store %arg10[%c15, %c0_87], %404 {strides = array<i32>} : memref<16x64xf32, #tpu.memory_space<vmem>>, vector<1x64xf32>,
    %c0_88 = arith.constant 0 : index
    %c0_89 = arith.constant 0 : index
    %405 = vector.load %arg10[%c0_88, %c0_89] : memref<16x64xf32, #tpu.memory_space<vmem>>, vector<16x64xf32>
    %c0_90 = arith.constant 0 : index
    %c0_91 = arith.constant 0 : index
    %406 = vector.load %arg7[%c0_90, %c0_91] : memref<64x1xf32, #tpu.memory_space<vmem>>, vector<64x1xf32>
    %cst_92 = arith.constant dense<0.000000e+00> : vector<16x1xf32>
    %407 = tpu.matmul %405, %406, %cst_92 {dimension_numbers = #tpu.dot_dimension_numbers<[1], [0], [0], [1], [0, 0, 1, 1], [], []>} : vector<16x64xf32>, vector<64x1xf32>, vector<16x1xf32> -> vector<16x1xf32>
    %c0_93 = arith.constant 0 : index
    %c0_94 = arith.constant 0 : index
    %408 = vector.load %arg8[%c0_93, %c0_94] : memref<1x1xf32, #tpu.memory_space<vmem>>, vector<1x1xf32>
    %409 = vector.broadcast %408 : vector<1x1xf32> to vector<16x1xf32>
    %410 = arith.addf %407, %409 : vector<16x1xf32>
    %c0_95 = arith.constant 0 : index
    %c0_96 = arith.constant 0 : index
    %411 = vector.load %arg9[%c0_95, %c0_96] : memref<16x1xf32, #tpu.memory_space<vmem>>, vector<16x1xf32>
    tpu.vector_store %arg9[%c0_95, %c0_96], %410 {strides = array<i32>} : memref<16x1xf32, #tpu.memory_space<vmem>>, vector<16x1xf32>,
    return
  }
}

</mosaic_0001>

<llo_original>
// kernel: tpu_custom_call.1
$region0: #{tpu_custom_call.1}
  #allocation0 [shape = 'u32[]', space=smem, size = 0x4, offset = 0x4, fixed_abs, tag = 'smem constant byte address 0x4 - core index']
  #allocation1 [shape = 'u32[72,128]{1,0:T(1,128)}', space=vmem, size = 0x9000, scoped, tag = 'internal scratch']
  #allocation2 [shape = 'f32[16,64]{1,0:T(8,128)}', space=vmem, size = 0x2000, scoped, tag = 'scratch operand']
  #allocation3 [shape = 'f32[1,1]{1,0:T(1,128)S(1)}', space=vmem, size = 0x200, scoped, tag = 'scoped memory for tpu_custom_call.1']
  %s0 = inlined_call_operand.vmem [shape: f32[2,32], index: 0, kind: input, shape index: {}]
  %s1 = inlined_call_operand.hbm [shape: f32[32,128], index: 1, kind: input, shape index: {}]
  %s2 = inlined_call_operand.hbm [shape: f32[32,128], index: 2, kind: input, shape index: {}]
  %s3 = inlined_call_operand.vmem [shape: f32[1,128], index: 3, kind: input, shape index: {}]
  %s4 = inlined_call_operand.vmem [shape: f32[32,256], index: 4, kind: input, shape index: {}]
  %s5 = inlined_call_operand.hbm [shape: f32[64,256], index: 5, kind: input, shape index: {}]
  %s6 = inlined_call_operand.vmem [shape: f32[1,256], index: 6, kind: input, shape index: {}]
  %s7 = inlined_call_operand.vmem [shape: f32[64,1], index: 7, kind: input, shape index: {}]
  %s8 = inlined_call_operand.<no memory space> [shape: f32[1,1], index: 8, kind: input, shape index: {}]
  %s9 = inlined_call_operand.vmem [shape: f32[16,1], index: 9, kind: output, shape index: {}]
  %s10 = sld [smem:[#allocation0]]
  $region58: #{tpu_custom_call.1} parent=0
    _
  %s12 = ssub.s32 1, %s10
  %s13 = scalar_select 0, %s12, %s10
  %v14 = vstv %s8
  %15 = vst [vmem:[#allocation3] sm:$0x1] %v14
  $region1: #{tpu_custom_call.1} parent=0
    #allocation4 [shape = 'u8[16384]{0}', space=vmem, size = 0x4000, scoped, tag = 'input window, operand 1, single buffered']
    #allocation5 [shape = 's32[1]{0}', space=sflag, size = 0x4, scoped, tag = 'scoped memory for tpu_custom_call.1']
    #allocation6 [shape = 'u8[16384]{0}', space=vmem, size = 0x4000, scoped, tag = 'input window, operand 2, single buffered']
    #allocation7 [shape = 's32[1]{0}', space=sflag, size = 0x4, scoped, tag = 'scoped memory for tpu_custom_call.1']
    #allocation8 [shape = 'u8[65536]{0}', space=vmem, size = 0x10000, scoped, tag = 'input window, operand 5, single buffered']
    %16 = vsyncpa [#allocation5], 0
    %17 = vsyncpa [#allocation7], 0
    // Predicated region
    $region2: #{tpu_custom_call.1} parent=1 // pred_check
      _
    $region3: #{tpu_custom_call.1} parent=1 // pred_check_branch
      %19 = sbr.rel (0) target = $region5
    $region4: #{tpu_custom_call.1} parent=1 // pred_region
      _
    $region5: #{tpu_custom_call.1} parent=1 // pred_fallthru
      _
    // Predicated region
    $region6: #{tpu_custom_call.1} parent=1 // pred_check
      _
    $region7: #{tpu_custom_call.1} parent=1 // pred_check_branch
      %21 = sbr.rel (0) target = $region9
    $region8: #{tpu_custom_call.1} parent=1 // pred_region
      %23 = vsyncadd [#allocation5], 0
      %s24 = sshll.u32 %s1, 4
      %s25 = int_to_ptr.hbm [resolvable:$true] %s24
      %s26 = sshll.u32 [#allocation4], 4
      %s27 = int_to_ptr.vmem [resolvable:$true] %s26
      %32 = dma.hbm_to_vmem [thread:$0]  %s25, 512, %s27, [#allocation5], 128, 128, 8
    $region9: #{tpu_custom_call.1} parent=1 // pred_fallthru
      _
    // Predicated region
    $region10: #{tpu_custom_call.1} parent=1 // pred_check
      _
    $region11: #{tpu_custom_call.1} parent=1 // pred_check_branch
      %34 = sbr.rel (0) target = $region13
    $region12: #{tpu_custom_call.1} parent=1 // pred_region
      %36 = vsyncadd [#allocation7], 0
      %s37 = sshll.u32 %s2, 4
      %s38 = int_to_ptr.hbm [resolvable:$true] %s37
      %s39 = sshll.u32 [#allocation6], 4
      %s40 = int_to_ptr.vmem [resolvable:$true] %s39
      %45 = dma.hbm_to_vmem [thread:$0]  %s38, 512, %s40, [#allocation7], 128, 128, 8
    $region13: #{tpu_custom_call.1} parent=1 // pred_fallthru
      _
    // Predicated region
    $region14: #{tpu_custom_call.1} parent=1 // pred_check
      _
    $region15: #{tpu_custom_call.1} parent=1 // pred_check_branch
      %47 = sbr.rel (0) target = $region17
    $region16: #{tpu_custom_call.1} parent=1 // pred_region
      _
    $region17: #{tpu_custom_call.1} parent=1 // pred_fallthru
      _
    // Predicated region
    $region18: #{tpu_custom_call.1} parent=1 // pred_check
      _
    $region19: #{tpu_custom_call.1} parent=1 // pred_check_branch
      %49 = sbr.rel (0) target = $region21
    $region20: #{tpu_custom_call.1} parent=1 // pred_region
      _
    $region21: #{tpu_custom_call.1} parent=1 // pred_fallthru
      _
    // Predicated region
    $region22: #{tpu_custom_call.1} parent=1 // pred_check
      _
    $region23: #{tpu_custom_call.1} parent=1 // pred_check_branch
      %51 = sbr.rel (0) target = $region25
    $region24: #{tpu_custom_call.1} parent=1 // pred_region
      %53 = vsyncadd [#allocation7], 0
      %s54 = sshll.u32 %s5, 4
      %s55 = int_to_ptr.hbm [resolvable:$true] %s54
      %s56 = sshll.u32 [#allocation8], 4
      %s57 = int_to_ptr.vmem [resolvable:$true] %s56
      %62 = dma.hbm_to_vmem [thread:$0]  %s55, 2048, %s57, [#allocation7], 256, 256, 16
    $region25: #{tpu_custom_call.1} parent=1 // pred_fallthru
      _
    // Predicated region
    $region26: #{tpu_custom_call.1} parent=1 // pred_check
      _
    $region27: #{tpu_custom_call.1} parent=1 // pred_check_branch
      %64 = sbr.rel (0) target = $region29
    $region28: #{tpu_custom_call.1} parent=1 // pred_region
      _
    $region29: #{tpu_custom_call.1} parent=1 // pred_fallthru
      _
    // Predicated region
    $region30: #{tpu_custom_call.1} parent=1 // pred_check
      _
    $region31: #{tpu_custom_call.1} parent=1 // pred_check_branch
      %66 = sbr.rel (0) target = $region33
    $region32: #{tpu_custom_call.1} parent=1 // pred_region
      _
    $region33: #{tpu_custom_call.1} parent=1 // pred_fallthru
      _
    // Predicated region
    $region34: #{tpu_custom_call.1} parent=1 // pred_check
      _
    $region35: #{tpu_custom_call.1} parent=1 // pred_check_branch
      %68 = sbr.rel (0) target = $region37
    $region36: #{tpu_custom_call.1} parent=1 // pred_region
      _
    $region37: #{tpu_custom_call.1} parent=1 // pred_fallthru
      _
    // Predicated region
    $region38: #{tpu_custom_call.1} parent=1 // pred_check
      _
    $region39: #{tpu_custom_call.1} parent=1 // pred_check_branch
      %70 = sbr.rel (0) target = $region41
    $region40: #{tpu_custom_call.1} parent=1 // pred_region
      %72 = dma.done [#allocation5], 512
    $region41: #{tpu_custom_call.1} parent=1 // pred_fallthru
      _
    // Predicated region
    $region42: #{tpu_custom_call.1} parent=1 // pred_check
      _
    $region43: #{tpu_custom_call.1} parent=1 // pred_check_branch
      %74 = sbr.rel (0) target = $region45
    $region44: #{tpu_custom_call.1} parent=1 // pred_region
      %76 = dma.done [#allocation7], 512
    $region45: #{tpu_custom_call.1} parent=1 // pred_fallthru
      _
    // Predicated region
    $region46: #{tpu_custom_call.1} parent=1 // pred_check
      _
    $region47: #{tpu_custom_call.1} parent=1 // pred_check_branch
      %78 = sbr.rel (0) target = $region49
    $region48: #{tpu_custom_call.1} parent=1 // pred_region
      %80 = dma.done [#allocation7], 2048
    $region49: #{tpu_custom_call.1} parent=1 // pred_fallthru
      _
    %v81 = vld [vmem:[#allocation6] sm:$0xff]
    %v82 = vld [vmem:[#allocation6 + $0x8] sm:$0xff]
    %v83 = vld [vmem:[#allocation6 + $0x10] sm:$0xff]
    %v84 = vld [vmem:[#allocation6 + $0x18] sm:$0xff]
    %v85 = vld [vmem:[%s4] sm:$0xff]
    %v86 = vld [vmem:[%s4 + $0x8] sm:$0xff]
    %v87 = vld [vmem:[%s4 + $0x10] sm:$0xff]
    %v88 = vld [vmem:[%s4 + $0x18] sm:$0xff]
    %v89 = vld [vmem:[%s4 + $0x20] sm:$0xff]
    %v90 = vld [vmem:[%s4 + $0x28] sm:$0xff]
    %v91 = vld [vmem:[%s4 + $0x30] sm:$0xff]
    %v92 = vld [vmem:[%s4 + $0x38] sm:$0xff]
    %v93 = vld [vmem:[#allocation8] sm:$0xff]
    %v94 = vld [vmem:[#allocation8 + $0x8] sm:$0xff]
    %v95 = vld [vmem:[#allocation8 + $0x10] sm:$0xff]
    %v96 = vld [vmem:[#allocation8 + $0x18] sm:$0xff]
    %v97 = vld [vmem:[#allocation8 + $0x20] sm:$0xff]
    %v98 = vld [vmem:[#allocation8 + $0x28] sm:$0xff]
    %v99 = vld [vmem:[#allocation8 + $0x30] sm:$0xff]
    %v100 = vld [vmem:[#allocation8 + $0x38] sm:$0xff]
    %v101 = vld [vmem:[#allocation8 + $0x40] sm:$0xff]
    %v102 = vld [vmem:[#allocation8 + $0x48] sm:$0xff]
    %v103 = vld [vmem:[#allocation8 + $0x50] sm:$0xff]
    %v104 = vld [vmem:[#allocation8 + $0x58] sm:$0xff]
    %v105 = vld [vmem:[#allocation8 + $0x60] sm:$0xff]
    %v106 = vld [vmem:[#allocation8 + $0x68] sm:$0xff]
    %v107 = vld [vmem:[#allocation8 + $0x70] sm:$0xff]
    %v108 = vld [vmem:[#allocation8 + $0x78] sm:$0xff]
    %v109 = vld [vmem:[%s6] sm:$0x3]
    %v111 = vperm.slane %v109, 0
    %v112 = vperm.slane %v109, 1
    %v115 = vld [vmem:[%s0] sm:$0x3]
    %v116 = vld [vmem:[#allocation4] sm:$0xff]
    %v117 = vld [vmem:[#allocation4 + $0x8] sm:$0xff]
    %v118 = vld [vmem:[#allocation4 + $0x10] sm:$0xff]
    %v119 = vld [vmem:[#allocation4 + $0x18] sm:$0xff]
    %v120 = vld [vmem:[%s3] sm:$0x1]
    %v122 = vperm.slane %v120, 0
    %vm124 = vcmask 261120
    %v126 = vsel %vm124, %v115, 0
    %128 = vmatpush.msra.mxu0 0.0
    %129 = vmatpush.msra.mxu0 0.0
    %130 = vmatpush.msra.mxu0 0.0
    %131 = vmatpush.msra.mxu0 0.0
    %132 = vmatpush.msra.mxu0 0.0
    %133 = vmatpush.msra.mxu0 0.0
    %134 = vmatpush.msra.mxu0 0.0
    %135 = vmatpush.msra.mxu0 0.0
    %136 = vmatpush.msra.mxu0 0.0
    %137 = vmatpush.msra.mxu0 0.0
    %138 = vmatpush.msra.mxu0 0.0
    %139 = vmatpush.msra.mxu0 0.0
    %140 = vmatpush.msra.mxu0 %v119
    %141 = vmatpush.msra.mxu0 %v118
    %142 = vmatpush.msra.mxu0 %v117
    %143 = vmatpush.msra.mxu0 %v116
    %144 = vmatmul.f32.gmra.mxu0 %v126
    %v145 = vpop.f32.mrf.mxu0
    %v146 = vadd.f32 %v122, %v145
    %147 = vdwg.mxu0
    %v148 = vperm.slane %v146, 0
    %v149 = vperm.slane %v146, 1
    %v151 = vsel %vm124, 0.0, 0
    %153 = vmatpush.msra.mxu0 0.0
    %154 = vmatpush.msra.mxu0 0.0
    %155 = vmatpush.msra.mxu0 0.0
    %156 = vmatpush.msra.mxu0 0.0
    %157 = vmatpush.msra.mxu0 0.0
    %158 = vmatpush.msra.mxu0 0.0
    %159 = vmatpush.msra.mxu0 0.0
    %160 = vmatpush.msra.mxu0 0.0
    %161 = vmatpush.msra.mxu0 0.0
    %162 = vmatpush.msra.mxu0 0.0
    %163 = vmatpush.msra.mxu0 0.0
    %164 = vmatpush.msra.mxu0 0.0
    %165 = vmatpush.msra.mxu0 %v84
    %166 = vmatpush.msra.mxu0 %v83
    %167 = vmatpush.msra.mxu0 %v82
    %168 = vmatpush.msra.mxu0 %v81
    %169 = vmatmul.f32.gmra.mxu0 %v151
    %v170 = vpop.f32.mrf.mxu0
    %v171 = vadd.f32 0.0, %v170
    %172 = vdwg.mxu0
    %v173 = vadd.f32 %v148, %v171
    %v174 = vtanh.pop %v173
    %v175 = vmul.f32 %v174, 0.5
    %v176 = vadd.f32 %v175, 0.5
    %v177 = vmul.f32 %v176, 0.0
    %179 = vrot.lane.b32.xlu0 %v174, 32
    %v180 = vpop.permute.xlu0 %179
    %v182 = vmul.f32 %v176, %v180
    %184 = vrot.lane.b32.xlu0 %v182, 32
    %v185 = vpop.permute.xlu0 %184
    %v187 = vadd.f32 %v177, %v185
    %v188 = vtanh.pop %v187
    %190 = vrot.lane.b32.xlu0 %v188, 32
    %v191 = vpop.permute.xlu0 %190
    %v193 = vmul.f32 %v176, %v191
    %195 = vrot.lane.b32.xlu0 %v193, 64
    %v196 = vpop.permute.xlu0 %195
    %v197 = vsel %vm124, %v196, 0
    %199 = vmatpush.msra.mxu0 0.0
    %200 = vmatpush.msra.mxu0 0.0
    %201 = vmatpush.msra.mxu0 0.0
    %202 = vmatpush.msra.mxu0 0.0
    %203 = vmatpush.msra.mxu0 0.0
    %204 = vmatpush.msra.mxu0 0.0
    %205 = vmatpush.msra.mxu0 0.0
    %206 = vmatpush.msra.mxu0 0.0
    %207 = vmatpush.msra.mxu0 0.0
    %208 = vmatpush.msra.mxu0 0.0
    %209 = vmatpush.msra.mxu0 0.0
    %210 = vmatpush.msra.mxu0 0.0
    %211 = vmatpush.msra.mxu0 %v91
    %212 = vmatpush.msra.mxu0 %v89
    %213 = vmatpush.msra.mxu0 %v87
    %214 = vmatpush.msra.mxu0 %v85
    %215 = vmatmul.f32.gmra.mxu0 %v197
    %v216 = vpop.f32.mrf.mxu0
    %v217 = vadd.f32 0.0, %v216
    %218 = vdwg.mxu0
    %219 = vmatpush.msra.mxu0 0.0
    %220 = vmatpush.msra.mxu0 0.0
    %221 = vmatpush.msra.mxu0 0.0
    %222 = vmatpush.msra.mxu0 0.0
    %223 = vmatpush.msra.mxu0 0.0
    %224 = vmatpush.msra.mxu0 0.0
    %225 = vmatpush.msra.mxu0 0.0
    %226 = vmatpush.msra.mxu0 0.0
    %227 = vmatpush.msra.mxu0 0.0
    %228 = vmatpush.msra.mxu0 0.0
    %229 = vmatpush.msra.mxu0 0.0
    %230 = vmatpush.msra.mxu0 0.0
    %231 = vmatpush.msra.mxu0 %v92
    %232 = vmatpush.msra.mxu0 %v90
    %233 = vmatpush.msra.mxu0 %v88
    %234 = vmatpush.msra.mxu0 %v86
    %235 = vmatmul.f32.gmra.mxu0 %v197
    %v236 = vpop.f32.mrf.mxu0
    %v237 = vadd.f32 0.0, %v236
    %238 = vdwg.mxu0
    %v239 = vadd.f32 %v111, %v217
    %v240 = vadd.f32 %v112, %v237
    %v241 = vtanh.pop %v239
    %v242 = vtanh.pop %v240
    %v243 = vmul.f32 %v241, 0.5
    %v244 = vmul.f32 %v242, 0.5
    %v245 = vadd.f32 %v243, 0.5
    %v246 = vadd.f32 %v244, 0.5
    %v247 = vmul.f32 %v245, 0.0
    %249 = vrot.lane.b32.xlu0 %v242, 64
    %v250 = vpop.permute.xlu0 %249
    %v252 = vmul.f32 %v245, %v250
    %254 = vrot.lane.b32.xlu0 %v252, 64
    %v255 = vpop.permute.xlu0 %254
    %v257 = vadd.f32 %v247, %v255
    %v258 = vtanh.pop %v257
    %260 = vrot.lane.b32.xlu0 %v258, 64
    %v261 = vpop.permute.xlu0 %260
    %v263 = vmul.f32 %v246, %v261
    %vm264 = vcmask 523264
    %v266 = vsel %vm264, %v263, 0
    %268 = vmatpush.msra.mxu0 0.0
    %269 = vmatpush.msra.mxu0 0.0
    %270 = vmatpush.msra.mxu0 0.0
    %271 = vmatpush.msra.mxu0 0.0
    %272 = vmatpush.msra.mxu0 0.0
    %273 = vmatpush.msra.mxu0 0.0
    %274 = vmatpush.msra.mxu0 0.0
    %275 = vmatpush.msra.mxu0 0.0
    %276 = vmatpush.msra.mxu0 %v107
    %277 = vmatpush.msra.mxu0 %v105
    %278 = vmatpush.msra.mxu0 %v103
    %279 = vmatpush.msra.mxu0 %v101
    %280 = vmatpush.msra.mxu0 %v99
    %281 = vmatpush.msra.mxu0 %v97
    %282 = vmatpush.msra.mxu0 %v95
    %283 = vmatpush.msra.mxu0 %v93
    %284 = vmatmul.f32.gmra.mxu0 %v266
    %v285 = vpop.f32.mrf.mxu0
    %v286 = vadd.f32 %v111, %v285
    %287 = vdwg.mxu0
    %288 = vmatpush.msra.mxu0 0.0
    %289 = vmatpush.msra.mxu0 0.0
    %290 = vmatpush.msra.mxu0 0.0
    %291 = vmatpush.msra.mxu0 0.0
    %292 = vmatpush.msra.mxu0 0.0
    %293 = vmatpush.msra.mxu0 0.0
    %294 = vmatpush.msra.mxu0 0.0
    %295 = vmatpush.msra.mxu0 0.0
    %296 = vmatpush.msra.mxu0 %v108
    %297 = vmatpush.msra.mxu0 %v106
    %298 = vmatpush.msra.mxu0 %v104
    %299 = vmatpush.msra.mxu0 %v102
    %300 = vmatpush.msra.mxu0 %v100
    %301 = vmatpush.msra.mxu0 %v98
    %302 = vmatpush.msra.mxu0 %v96
    %303 = vmatpush.msra.mxu0 %v94
    %304 = vmatmul.f32.gmra.mxu0 %v266
    %v305 = vpop.f32.mrf.mxu0
    %v306 = vadd.f32 %v112, %v305
    %307 = vdwg.mxu0
    %vm308 = vcmask 516096
    %309 = vst.msk [vmem:[#allocation2] sm:$0x1] %vm308, %v263
    %vm310 = vcmask 517121
    %311 = vst.msk [vmem:[#allocation2 + $0x7] sm:$0x2] %vm310, %v263
    %312 = vmatpush.msra.mxu0 0.0
    %313 = vmatpush.msra.mxu0 0.0
    %314 = vmatpush.msra.mxu0 0.0
    %315 = vmatpush.msra.mxu0 0.0
    %316 = vmatpush.msra.mxu0 0.0
    %317 = vmatpush.msra.mxu0 0.0
    %318 = vmatpush.msra.mxu0 0.0
    %319 = vmatpush.msra.mxu0 0.0
    %320 = vmatpush.msra.mxu0 0.0
    %321 = vmatpush.msra.mxu0 0.0
    %322 = vmatpush.msra.mxu0 0.0
    %323 = vmatpush.msra.mxu0 0.0
    %324 = vmatpush.msra.mxu0 %v84
    %325 = vmatpush.msra.mxu0 %v83
    %326 = vmatpush.msra.mxu0 %v82
    %327 = vmatpush.msra.mxu0 %v81
    %328 = vmatmul.f32.gmra.mxu0 %v197
    %v329 = vpop.f32.mrf.mxu0
    %v330 = vadd.f32 0.0, %v329
    %331 = vdwg.mxu0
    %v332 = vadd.f32 %v149, %v330
    %v333 = vtanh.pop %v332
    %v334 = vmul.f32 %v333, 0.5
    %v335 = vadd.f32 %v334, 0.5
    %v336 = vmul.f32 %v335, %v187
    %338 = vrot.lane.b32.xlu0 %v333, 32
    %v339 = vpop.permute.xlu0 %338
    %v341 = vmul.f32 %v335, %v339
    %343 = vrot.lane.b32.xlu0 %v341, 32
    %v344 = vpop.permute.xlu0 %343
    %v346 = vadd.f32 %v336, %v344
    %v347 = vtanh.pop %v346
    %349 = vrot.lane.b32.xlu0 %v347, 32
    %v350 = vpop.permute.xlu0 %349
    %v352 = vmul.f32 %v335, %v350
    %354 = vrot.lane.b32.xlu0 %v352, 64
    %v355 = vpop.permute.xlu0 %354
    %v356 = vsel %vm124, %v355, 0
    %358 = vmatpush.msra.mxu0 0.0
    %359 = vmatpush.msra.mxu0 0.0
    %360 = vmatpush.msra.mxu0 0.0
    %361 = vmatpush.msra.mxu0 0.0
    %362 = vmatpush.msra.mxu0 0.0
    %363 = vmatpush.msra.mxu0 0.0
    %364 = vmatpush.msra.mxu0 0.0
    %365 = vmatpush.msra.mxu0 0.0
    %366 = vmatpush.msra.mxu0 0.0
    %367 = vmatpush.msra.mxu0 0.0
    %368 = vmatpush.msra.mxu0 0.0
    %369 = vmatpush.msra.mxu0 0.0
    %370 = vmatpush.msra.mxu0 %v91
    %371 = vmatpush.msra.mxu0 %v89
    %372 = vmatpush.msra.mxu0 %v87
    %373 = vmatpush.msra.mxu0 %v85
    %374 = vmatmul.f32.gmra.mxu0 %v356
    %v375 = vpop.f32.mrf.mxu0
    %v376 = vadd.f32 0.0, %v375
    %377 = vdwg.mxu0
    %378 = vmatpush.msra.mxu0 0.0
    %379 = vmatpush.msra.mxu0 0.0
    %380 = vmatpush.msra.mxu0 0.0
    %381 = vmatpush.msra.mxu0 0.0
    %382 = vmatpush.msra.mxu0 0.0
    %383 = vmatpush.msra.mxu0 0.0
    %384 = vmatpush.msra.mxu0 0.0
    %385 = vmatpush.msra.mxu0 0.0
    %386 = vmatpush.msra.mxu0 0.0
    %387 = vmatpush.msra.mxu0 0.0
    %388 = vmatpush.msra.mxu0 0.0
    %389 = vmatpush.msra.mxu0 0.0
    %390 = vmatpush.msra.mxu0 %v92
    %391 = vmatpush.msra.mxu0 %v90
    %392 = vmatpush.msra.mxu0 %v88
    %393 = vmatpush.msra.mxu0 %v86
    %394 = vmatmul.f32.gmra.mxu0 %v356
    %v395 = vpop.f32.mrf.mxu0
    %v396 = vadd.f32 0.0, %v395
    %397 = vdwg.mxu0
    %v398 = vadd.f32 %v286, %v376
    %v399 = vadd.f32 %v306, %v396
    %v400 = vtanh.pop %v398
    %v401 = vtanh.pop %v399
    %v402 = vmul.f32 %v400, 0.5
    %v403 = vmul.f32 %v401, 0.5
    %v404 = vadd.f32 %v402, 0.5
    %v405 = vadd.f32 %v403, 0.5
    %v406 = vmul.f32 %v404, %v257
    %408 = vrot.lane.b32.xlu0 %v401, 64
    %v409 = vpop.permute.xlu0 %408
    %v411 = vmul.f32 %v404, %v409
    %413 = vrot.lane.b32.xlu0 %v411, 64
    %v414 = vpop.permute.xlu0 %413
    %v416 = vadd.f32 %v406, %v414
    %v417 = vtanh.pop %v416
    %419 = vrot.lane.b32.xlu0 %v417, 64
    %v420 = vpop.permute.xlu0 %419
    %v422 = vmul.f32 %v405, %v420
    %v424 = vsel %vm264, %v422, 0
    %426 = vmatpush.msra.mxu0 0.0
    %427 = vmatpush.msra.mxu0 0.0
    %428 = vmatpush.msra.mxu0 0.0
    %429 = vmatpush.msra.mxu0 0.0
    %430 = vmatpush.msra.mxu0 0.0
    %431 = vmatpush.msra.mxu0 0.0
    %432 = vmatpush.msra.mxu0 0.0
    %433 = vmatpush.msra.mxu0 0.0
    %434 = vmatpush.msra.mxu0 %v107
    %435 = vmatpush.msra.mxu0 %v105
    %436 = vmatpush.msra.mxu0 %v103
    %437 = vmatpush.msra.mxu0 %v101
    %438 = vmatpush.msra.mxu0 %v99
    %439 = vmatpush.msra.mxu0 %v97
    %440 = vmatpush.msra.mxu0 %v95
    %441 = vmatpush.msra.mxu0 %v93
    %442 = vmatmul.f32.gmra.mxu0 %v424
    %v443 = vpop.f32.mrf.mxu0
    %v444 = vadd.f32 %v111, %v443
    %445 = vdwg.mxu0
    %446 = vmatpush.msra.mxu0 0.0
    %447 = vmatpush.msra.mxu0 0.0
    %448 = vmatpush.msra.mxu0 0.0
    %449 = vmatpush.msra.mxu0 0.0
    %450 = vmatpush.msra.mxu0 0.0
    %451 = vmatpush.msra.mxu0 0.0
    %452 = vmatpush.msra.mxu0 0.0
    %453 = vmatpush.msra.mxu0 0.0
    %454 = vmatpush.msra.mxu0 %v108
    %455 = vmatpush.msra.mxu0 %v106
    %456 = vmatpush.msra.mxu0 %v104
    %457 = vmatpush.msra.mxu0 %v102
    %458 = vmatpush.msra.mxu0 %v100
    %459 = vmatpush.msra.mxu0 %v98
    %460 = vmatpush.msra.mxu0 %v96
    %461 = vmatpush.msra.mxu0 %v94
    %462 = vmatmul.f32.gmra.mxu0 %v424
    %v463 = vpop.f32.mrf.mxu0
    %v464 = vadd.f32 %v112, %v463
    %465 = vdwg.mxu0
    %466 = vst.msk [vmem:[#allocation2 + $0x1] sm:$0x1] %vm308, %v422
    %467 = vst.msk [vmem:[#allocation2 + $0x8] sm:$0x2] %vm310, %v422
    %468 = vmatpush.msra.mxu0 0.0
    %469 = vmatpush.msra.mxu0 0.0
    %470 = vmatpush.msra.mxu0 0.0
    %471 = vmatpush.msra.mxu0 0.0
    %472 = vmatpush.msra.mxu0 0.0
    %473 = vmatpush.msra.mxu0 0.0
    %474 = vmatpush.msra.mxu0 0.0
    %475 = vmatpush.msra.mxu0 0.0
    %476 = vmatpush.msra.mxu0 0.0
    %477 = vmatpush.msra.mxu0 0.0
    %478 = vmatpush.msra.mxu0 0.0
    %479 = vmatpush.msra.mxu0 0.0
    %480 = vmatpush.msra.mxu0 %v84
    %481 = vmatpush.msra.mxu0 %v83
    %482 = vmatpush.msra.mxu0 %v82
    %483 = vmatpush.msra.mxu0 %v81
    %484 = vmatmul.f32.gmra.mxu0 %v356
    %v485 = vpop.f32.mrf.mxu0
    %v486 = vadd.f32 0.0, %v485
    %487 = vdwg.mxu0
    %v488 = vadd.f32 %v148, %v486
    %v489 = vtanh.pop %v488
    %v490 = vmul.f32 %v489, 0.5
    %v491 = vadd.f32 %v490, 0.5
    %v492 = vmul.f32 %v491, %v346
    %494 = vrot.lane.b32.xlu0 %v489, 32
    %v495 = vpop.permute.xlu0 %494
    %v497 = vmul.f32 %v491, %v495
    %499 = vrot.lane.b32.xlu0 %v497, 32
    %v500 = vpop.permute.xlu0 %499
    %v502 = vadd.f32 %v492, %v500
    %v503 = vtanh.pop %v502
    %505 = vrot.lane.b32.xlu0 %v503, 32
    %v506 = vpop.permute.xlu0 %505
    %v508 = vmul.f32 %v491, %v506
    %510 = vrot.lane.b32.xlu0 %v508, 64
    %v511 = vpop.permute.xlu0 %510
    %v512 = vsel %vm124, %v511, 0
    %514 = vmatpush.msra.mxu0 0.0
    %515 = vmatpush.msra.mxu0 0.0
    %516 = vmatpush.msra.mxu0 0.0
    %517 = vmatpush.msra.mxu0 0.0
    %518 = vmatpush.msra.mxu0 0.0
    %519 = vmatpush.msra.mxu0 0.0
    %520 = vmatpush.msra.mxu0 0.0
    %521 = vmatpush.msra.mxu0 0.0
    %522 = vmatpush.msra.mxu0 0.0
    %523 = vmatpush.msra.mxu0 0.0
    %524 = vmatpush.msra.mxu0 0.0
    %525 = vmatpush.msra.mxu0 0.0
    %526 = vmatpush.msra.mxu0 %v91
    %527 = vmatpush.msra.mxu0 %v89
    %528 = vmatpush.msra.mxu0 %v87
    %529 = vmatpush.msra.mxu0 %v85
    %530 = vmatmul.f32.gmra.mxu0 %v512
    %v531 = vpop.f32.mrf.mxu0
    %v532 = vadd.f32 0.0, %v531
    %533 = vdwg.mxu0
    %534 = vmatpush.msra.mxu0 0.0
    %535 = vmatpush.msra.mxu0 0.0
    %536 = vmatpush.msra.mxu0 0.0
    %537 = vmatpush.msra.mxu0 0.0
    %538 = vmatpush.msra.mxu0 0.0
    %539 = vmatpush.msra.mxu0 0.0
    %540 = vmatpush.msra.mxu0 0.0
    %541 = vmatpush.msra.mxu0 0.0
    %542 = vmatpush.msra.mxu0 0.0
    %543 = vmatpush.msra.mxu0 0.0
    %544 = vmatpush.msra.mxu0 0.0
    %545 = vmatpush.msra.mxu0 0.0
    %546 = vmatpush.msra.mxu0 %v92
    %547 = vmatpush.msra.mxu0 %v90
    %548 = vmatpush.msra.mxu0 %v88
    %549 = vmatpush.msra.mxu0 %v86
    %550 = vmatmul.f32.gmra.mxu0 %v512
    %v551 = vpop.f32.mrf.mxu0
    %v552 = vadd.f32 0.0, %v551
    %553 = vdwg.mxu0
    %v554 = vadd.f32 %v444, %v532
    %v555 = vadd.f32 %v464, %v552
    %v556 = vtanh.pop %v554
    %v557 = vtanh.pop %v555
    %v558 = vmul.f32 %v556, 0.5
    %v559 = vmul.f32 %v557, 0.5
    %v560 = vadd.f32 %v558, 0.5
    %v561 = vadd.f32 %v559, 0.5
    %v562 = vmul.f32 %v560, %v416
    %564 = vrot.lane.b32.xlu0 %v557, 64
    %v565 = vpop.permute.xlu0 %564
    %v567 = vmul.f32 %v560, %v565
    %569 = vrot.lane.b32.xlu0 %v567, 64
    %v570 = vpop.permute.xlu0 %569
    %v572 = vadd.f32 %v562, %v570
    %v573 = vtanh.pop %v572
    %575 = vrot.lane.b32.xlu0 %v573, 64
    %v576 = vpop.permute.xlu0 %575
    %v578 = vmul.f32 %v561, %v576
    %v580 = vsel %vm264, %v578, 0
    %582 = vmatpush.msra.mxu0 0.0
    %583 = vmatpush.msra.mxu0 0.0
    %584 = vmatpush.msra.mxu0 0.0
    %585 = vmatpush.msra.mxu0 0.0
    %586 = vmatpush.msra.mxu0 0.0
    %587 = vmatpush.msra.mxu0 0.0
    %588 = vmatpush.msra.mxu0 0.0
    %589 = vmatpush.msra.mxu0 0.0
    %590 = vmatpush.msra.mxu0 %v107
    %591 = vmatpush.msra.mxu0 %v105
    %592 = vmatpush.msra.mxu0 %v103
    %593 = vmatpush.msra.mxu0 %v101
    %594 = vmatpush.msra.mxu0 %v99
    %595 = vmatpush.msra.mxu0 %v97
    %596 = vmatpush.msra.mxu0 %v95
    %597 = vmatpush.msra.mxu0 %v93
    %598 = vmatmul.f32.gmra.mxu0 %v580
    %v599 = vpop.f32.mrf.mxu0
    %v600 = vadd.f32 %v111, %v599
    %601 = vdwg.mxu0
    %602 = vmatpush.msra.mxu0 0.0
    %603 = vmatpush.msra.mxu0 0.0
    %604 = vmatpush.msra.mxu0 0.0
    %605 = vmatpush.msra.mxu0 0.0
    %606 = vmatpush.msra.mxu0 0.0
    %607 = vmatpush.msra.mxu0 0.0
    %608 = vmatpush.msra.mxu0 0.0
    %609 = vmatpush.msra.mxu0 0.0
    %610 = vmatpush.msra.mxu0 %v108
    %611 = vmatpush.msra.mxu0 %v106
    %612 = vmatpush.msra.mxu0 %v104
    %613 = vmatpush.msra.mxu0 %v102
    %614 = vmatpush.msra.mxu0 %v100
    %615 = vmatpush.msra.mxu0 %v98
    %616 = vmatpush.msra.mxu0 %v96
    %617 = vmatpush.msra.mxu0 %v94
    %618 = vmatmul.f32.gmra.mxu0 %v580
    %v619 = vpop.f32.mrf.mxu0
    %v620 = vadd.f32 %v112, %v619
    %621 = vdwg.mxu0
    %622 = vst.msk [vmem:[#allocation2 + $0x2] sm:$0x1] %vm308, %v578
    %623 = vst.msk [vmem:[#allocation2 + $0x9] sm:$0x2] %vm310, %v578
    %624 = vmatpush.msra.mxu0 0.0
    %625 = vmatpush.msra.mxu0 0.0
    %626 = vmatpush.msra.mxu0 0.0
    %627 = vmatpush.msra.mxu0 0.0
    %628 = vmatpush.msra.mxu0 0.0
    %629 = vmatpush.msra.mxu0 0.0
    %630 = vmatpush.msra.mxu0 0.0
    %631 = vmatpush.msra.mxu0 0.0
    %632 = vmatpush.msra.mxu0 0.0
    %633 = vmatpush.msra.mxu0 0.0
    %634 = vmatpush.msra.mxu0 0.0
    %635 = vmatpush.msra.mxu0 0.0
    %636 = vmatpush.msra.mxu0 %v84
    %637 = vmatpush.msra.mxu0 %v83
    %638 = vmatpush.msra.mxu0 %v82
    %639 = vmatpush.msra.mxu0 %v81
    %640 = vmatmul.f32.gmra.mxu0 %v512
    %v641 = vpop.f32.mrf.mxu0
    %v642 = vadd.f32 0.0, %v641
    %643 = vdwg.mxu0
    %v644 = vadd.f32 %v149, %v642
    %v645 = vtanh.pop %v644
    %v646 = vmul.f32 %v645, 0.5
    %v647 = vadd.f32 %v646, 0.5
    %v648 = vmul.f32 %v647, %v502
    %650 = vrot.lane.b32.xlu0 %v645, 32
    %v651 = vpop.permute.xlu0 %650
    %v653 = vmul.f32 %v647, %v651
    %655 = vrot.lane.b32.xlu0 %v653, 32
    %v656 = vpop.permute.xlu0 %655
    %v658 = vadd.f32 %v648, %v656
    %v659 = vtanh.pop %v658
    %661 = vrot.lane.b32.xlu0 %v659, 32
    %v662 = vpop.permute.xlu0 %661
    %v664 = vmul.f32 %v647, %v662
    %666 = vrot.lane.b32.xlu0 %v664, 64
    %v667 = vpop.permute.xlu0 %666
    %v668 = vsel %vm124, %v667, 0
    %670 = vmatpush.msra.mxu0 0.0
    %671 = vmatpush.msra.mxu0 0.0
    %672 = vmatpush.msra.mxu0 0.0
    %673 = vmatpush.msra.mxu0 0.0
    %674 = vmatpush.msra.mxu0 0.0
    %675 = vmatpush.msra.mxu0 0.0
    %676 = vmatpush.msra.mxu0 0.0
    %677 = vmatpush.msra.mxu0 0.0
    %678 = vmatpush.msra.mxu0 0.0
    %679 = vmatpush.msra.mxu0 0.0
    %680 = vmatpush.msra.mxu0 0.0
    %681 = vmatpush.msra.mxu0 0.0
    %682 = vmatpush.msra.mxu0 %v91
    %683 = vmatpush.msra.mxu0 %v89
    %684 = vmatpush.msra.mxu0 %v87
    %685 = vmatpush.msra.mxu0 %v85
    %686 = vmatmul.f32.gmra.mxu0 %v668
    %v687 = vpop.f32.mrf.mxu0
    %v688 = vadd.f32 0.0, %v687
    %689 = vdwg.mxu0
    %690 = vmatpush.msra.mxu0 0.0
    %691 = vmatpush.msra.mxu0 0.0
    %692 = vmatpush.msra.mxu0 0.0
    %693 = vmatpush.msra.mxu0 0.0
    %694 = vmatpush.msra.mxu0 0.0
    %695 = vmatpush.msra.mxu0 0.0
    %696 = vmatpush.msra.mxu0 0.0
    %697 = vmatpush.msra.mxu0 0.0
    %698 = vmatpush.msra.mxu0 0.0
    %699 = vmatpush.msra.mxu0 0.0
    %700 = vmatpush.msra.mxu0 0.0
    %701 = vmatpush.msra.mxu0 0.0
    %702 = vmatpush.msra.mxu0 %v92
    %703 = vmatpush.msra.mxu0 %v90
    %704 = vmatpush.msra.mxu0 %v88
    %705 = vmatpush.msra.mxu0 %v86
    %706 = vmatmul.f32.gmra.mxu0 %v668
    %v707 = vpop.f32.mrf.mxu0
    %v708 = vadd.f32 0.0, %v707
    %709 = vdwg.mxu0
    %v710 = vadd.f32 %v600, %v688
    %v711 = vadd.f32 %v620, %v708
    %v712 = vtanh.pop %v710
    %v713 = vtanh.pop %v711
    %v714 = vmul.f32 %v712, 0.5
    %v715 = vmul.f32 %v713, 0.5
    %v716 = vadd.f32 %v714, 0.5
    %v717 = vadd.f32 %v715, 0.5
    %v718 = vmul.f32 %v716, %v572
    %720 = vrot.lane.b32.xlu0 %v713, 64
    %v721 = vpop.permute.xlu0 %720
    %v723 = vmul.f32 %v716, %v721
    %725 = vrot.lane.b32.xlu0 %v723, 64
    %v726 = vpop.permute.xlu0 %725
    %v728 = vadd.f32 %v718, %v726
    %v729 = vtanh.pop %v728
    %731 = vrot.lane.b32.xlu0 %v729, 64
    %v732 = vpop.permute.xlu0 %731
    %v734 = vmul.f32 %v717, %v732
    %v736 = vsel %vm264, %v734, 0
    %738 = vmatpush.msra.mxu0 0.0
    %739 = vmatpush.msra.mxu0 0.0
    %740 = vmatpush.msra.mxu0 0.0
    %741 = vmatpush.msra.mxu0 0.0
    %742 = vmatpush.msra.mxu0 0.0
    %743 = vmatpush.msra.mxu0 0.0
    %744 = vmatpush.msra.mxu0 0.0
    %745 = vmatpush.msra.mxu0 0.0
    %746 = vmatpush.msra.mxu0 %v107
    %747 = vmatpush.msra.mxu0 %v105
    %748 = vmatpush.msra.mxu0 %v103
    %749 = vmatpush.msra.mxu0 %v101
    %750 = vmatpush.msra.mxu0 %v99
    %751 = vmatpush.msra.mxu0 %v97
    %752 = vmatpush.msra.mxu0 %v95
    %753 = vmatpush.msra.mxu0 %v93
    %754 = vmatmul.f32.gmra.mxu0 %v736
    %v755 = vpop.f32.mrf.mxu0
    %v756 = vadd.f32 %v111, %v755
    %757 = vdwg.mxu0
    %758 = vmatpush.msra.mxu0 0.0
    %759 = vmatpush.msra.mxu0 0.0
    %760 = vmatpush.msra.mxu0 0.0
    %761 = vmatpush.msra.mxu0 0.0
    %762 = vmatpush.msra.mxu0 0.0
    %763 = vmatpush.msra.mxu0 0.0
    %764 = vmatpush.msra.mxu0 0.0
    %765 = vmatpush.msra.mxu0 0.0
    %766 = vmatpush.msra.mxu0 %v108
    %767 = vmatpush.msra.mxu0 %v106
    %768 = vmatpush.msra.mxu0 %v104
    %769 = vmatpush.msra.mxu0 %v102
    %770 = vmatpush.msra.mxu0 %v100
    %771 = vmatpush.msra.mxu0 %v98
    %772 = vmatpush.msra.mxu0 %v96
    %773 = vmatpush.msra.mxu0 %v94
    %774 = vmatmul.f32.gmra.mxu0 %v736
    %v775 = vpop.f32.mrf.mxu0
    %v776 = vadd.f32 %v112, %v775
    %777 = vdwg.mxu0
    %778 = vst.msk [vmem:[#allocation2 + $0x3] sm:$0x1] %vm308, %v734
    %779 = vst.msk [vmem:[#allocation2 + $0xa] sm:$0x2] %vm310, %v734
    %780 = vmatpush.msra.mxu0 0.0
    %781 = vmatpush.msra.mxu0 0.0
    %782 = vmatpush.msra.mxu0 0.0
    %783 = vmatpush.msra.mxu0 0.0
    %784 = vmatpush.msra.mxu0 0.0
    %785 = vmatpush.msra.mxu0 0.0
    %786 = vmatpush.msra.mxu0 0.0
    %787 = vmatpush.msra.mxu0 0.0
    %788 = vmatpush.msra.mxu0 0.0
    %789 = vmatpush.msra.mxu0 0.0
    %790 = vmatpush.msra.mxu0 0.0
    %791 = vmatpush.msra.mxu0 0.0
    %792 = vmatpush.msra.mxu0 %v84
    %793 = vmatpush.msra.mxu0 %v83
    %794 = vmatpush.msra.mxu0 %v82
    %795 = vmatpush.msra.mxu0 %v81
    %796 = vmatmul.f32.gmra.mxu0 %v668
    %v797 = vpop.f32.mrf.mxu0
    %v798 = vadd.f32 0.0, %v797
    %799 = vdwg.mxu0
    %v800 = vadd.f32 %v148, %v798
    %v801 = vtanh.pop %v800
    %v802 = vmul.f32 %v801, 0.5
    %v803 = vadd.f32 %v802, 0.5
    %v804 = vmul.f32 %v803, %v658
    %806 = vrot.lane.b32.xlu0 %v801, 32
    %v807 = vpop.permute.xlu0 %806
    %v809 = vmul.f32 %v803, %v807
    %811 = vrot.lane.b32.xlu0 %v809, 32
    %v812 = vpop.permute.xlu0 %811
    %v814 = vadd.f32 %v804, %v812
    %v815 = vtanh.pop %v814
    %817 = vrot.lane.b32.xlu0 %v815, 32
    %v818 = vpop.permute.xlu0 %817
    %v820 = vmul.f32 %v803, %v818
    %822 = vrot.lane.b32.xlu0 %v820, 64
    %v823 = vpop.permute.xlu0 %822
    %v824 = vsel %vm124, %v823, 0
    %826 = vmatpush.msra.mxu0 0.0
    %827 = vmatpush.msra.mxu0 0.0
    %828 = vmatpush.msra.mxu0 0.0
    %829 = vmatpush.msra.mxu0 0.0
    %830 = vmatpush.msra.mxu0 0.0
    %831 = vmatpush.msra.mxu0 0.0
    %832 = vmatpush.msra.mxu0 0.0
    %833 = vmatpush.msra.mxu0 0.0
    %834 = vmatpush.msra.mxu0 0.0
    %835 = vmatpush.msra.mxu0 0.0
    %836 = vmatpush.msra.mxu0 0.0
    %837 = vmatpush.msra.mxu0 0.0
    %838 = vmatpush.msra.mxu0 %v91
    %839 = vmatpush.msra.mxu0 %v89
    %840 = vmatpush.msra.mxu0 %v87
    %841 = vmatpush.msra.mxu0 %v85
    %842 = vmatmul.f32.gmra.mxu0 %v824
    %v843 = vpop.f32.mrf.mxu0
    %v844 = vadd.f32 0.0, %v843
    %845 = vdwg.mxu0
    %846 = vmatpush.msra.mxu0 0.0
    %847 = vmatpush.msra.mxu0 0.0
    %848 = vmatpush.msra.mxu0 0.0
    %849 = vmatpush.msra.mxu0 0.0
    %850 = vmatpush.msra.mxu0 0.0
    %851 = vmatpush.msra.mxu0 0.0
    %852 = vmatpush.msra.mxu0 0.0
    %853 = vmatpush.msra.mxu0 0.0
    %854 = vmatpush.msra.mxu0 0.0
    %855 = vmatpush.msra.mxu0 0.0
    %856 = vmatpush.msra.mxu0 0.0
    %857 = vmatpush.msra.mxu0 0.0
    %858 = vmatpush.msra.mxu0 %v92
    %859 = vmatpush.msra.mxu0 %v90
    %860 = vmatpush.msra.mxu0 %v88
    %861 = vmatpush.msra.mxu0 %v86
    %862 = vmatmul.f32.gmra.mxu0 %v824
    %v863 = vpop.f32.mrf.mxu0
    %v864 = vadd.f32 0.0, %v863
    %865 = vdwg.mxu0
    %v866 = vadd.f32 %v756, %v844
    %v867 = vadd.f32 %v776, %v864
    %v868 = vtanh.pop %v866
    %v869 = vtanh.pop %v867
    %v870 = vmul.f32 %v868, 0.5
    %v871 = vmul.f32 %v869, 0.5
    %v872 = vadd.f32 %v870, 0.5
    %v873 = vadd.f32 %v871, 0.5
    %v874 = vmul.f32 %v872, %v728
    %876 = vrot.lane.b32.xlu0 %v869, 64
    %v877 = vpop.permute.xlu0 %876
    %v879 = vmul.f32 %v872, %v877
    %881 = vrot.lane.b32.xlu0 %v879, 64
    %v882 = vpop.permute.xlu0 %881
    %v884 = vadd.f32 %v874, %v882
    %v885 = vtanh.pop %v884
    %887 = vrot.lane.b32.xlu0 %v885, 64
    %v888 = vpop.permute.xlu0 %887
    %v890 = vmul.f32 %v873, %v888
    %v892 = vsel %vm264, %v890, 0
    %894 = vmatpush.msra.mxu0 0.0
    %895 = vmatpush.msra.mxu0 0.0
    %896 = vmatpush.msra.mxu0 0.0
    %897 = vmatpush.msra.mxu0 0.0
    %898 = vmatpush.msra.mxu0 0.0
    %899 = vmatpush.msra.mxu0 0.0
    %900 = vmatpush.msra.mxu0 0.0
    %901 = vmatpush.msra.mxu0 0.0
    %902 = vmatpush.msra.mxu0 %v107
    %903 = vmatpush.msra.mxu0 %v105
    %904 = vmatpush.msra.mxu0 %v103
    %905 = vmatpush.msra.mxu0 %v101
    %906 = vmatpush.msra.mxu0 %v99
    %907 = vmatpush.msra.mxu0 %v97
    %908 = vmatpush.msra.mxu0 %v95
    %909 = vmatpush.msra.mxu0 %v93
    %910 = vmatmul.f32.gmra.mxu0 %v892
    %v911 = vpop.f32.mrf.mxu0
    %v912 = vadd.f32 %v111, %v911
    %913 = vdwg.mxu0
    %914 = vmatpush.msra.mxu0 0.0
    %915 = vmatpush.msra.mxu0 0.0
    %916 = vmatpush.msra.mxu0 0.0
    %917 = vmatpush.msra.mxu0 0.0
    %918 = vmatpush.msra.mxu0 0.0
    %919 = vmatpush.msra.mxu0 0.0
    %920 = vmatpush.msra.mxu0 0.0
    %921 = vmatpush.msra.mxu0 0.0
    %922 = vmatpush.msra.mxu0 %v108
    %923 = vmatpush.msra.mxu0 %v106
    %924 = vmatpush.msra.mxu0 %v104
    %925 = vmatpush.msra.mxu0 %v102
    %926 = vmatpush.msra.mxu0 %v100
    %927 = vmatpush.msra.mxu0 %v98
    %928 = vmatpush.msra.mxu0 %v96
    %929 = vmatpush.msra.mxu0 %v94
    %930 = vmatmul.f32.gmra.mxu0 %v892
    %v931 = vpop.f32.mrf.mxu0
    %v932 = vadd.f32 %v112, %v931
    %933 = vdwg.mxu0
    %934 = vst.msk [vmem:[#allocation2 + $0x4] sm:$0x1] %vm308, %v890
    %935 = vst.msk [vmem:[#allocation2 + $0xb] sm:$0x2] %vm310, %v890
    %936 = vmatpush.msra.mxu0 0.0
    %937 = vmatpush.msra.mxu0 0.0
    %938 = vmatpush.msra.mxu0 0.0
    %939 = vmatpush.msra.mxu0 0.0
    %940 = vmatpush.msra.mxu0 0.0
    %941 = vmatpush.msra.mxu0 0.0
    %942 = vmatpush.msra.mxu0 0.0
    %943 = vmatpush.msra.mxu0 0.0
    %944 = vmatpush.msra.mxu0 0.0
    %945 = vmatpush.msra.mxu0 0.0
    %946 = vmatpush.msra.mxu0 0.0
    %947 = vmatpush.msra.mxu0 0.0
    %948 = vmatpush.msra.mxu0 %v84
    %949 = vmatpush.msra.mxu0 %v83
    %950 = vmatpush.msra.mxu0 %v82
    %951 = vmatpush.msra.mxu0 %v81
    %952 = vmatmul.f32.gmra.mxu0 %v824
    %v953 = vpop.f32.mrf.mxu0
    %v954 = vadd.f32 0.0, %v953
    %955 = vdwg.mxu0
    %v956 = vadd.f32 %v149, %v954
    %v957 = vtanh.pop %v956
    %v958 = vmul.f32 %v957, 0.5
    %v959 = vadd.f32 %v958, 0.5
    %v960 = vmul.f32 %v959, %v814
    %962 = vrot.lane.b32.xlu0 %v957, 32
    %v963 = vpop.permute.xlu0 %962
    %v965 = vmul.f32 %v959, %v963
    %967 = vrot.lane.b32.xlu0 %v965, 32
    %v968 = vpop.permute.xlu0 %967
    %v970 = vadd.f32 %v960, %v968
    %v971 = vtanh.pop %v970
    %973 = vrot.lane.b32.xlu0 %v971, 32
    %v974 = vpop.permute.xlu0 %973
    %v976 = vmul.f32 %v959, %v974
    %978 = vrot.lane.b32.xlu0 %v976, 64
    %v979 = vpop.permute.xlu0 %978
    %v980 = vsel %vm124, %v979, 0
    %982 = vmatpush.msra.mxu0 0.0
    %983 = vmatpush.msra.mxu0 0.0
    %984 = vmatpush.msra.mxu0 0.0
    %985 = vmatpush.msra.mxu0 0.0
    %986 = vmatpush.msra.mxu0 0.0
    %987 = vmatpush.msra.mxu0 0.0
    %988 = vmatpush.msra.mxu0 0.0
    %989 = vmatpush.msra.mxu0 0.0
    %990 = vmatpush.msra.mxu0 0.0
    %991 = vmatpush.msra.mxu0 0.0
    %992 = vmatpush.msra.mxu0 0.0
    %993 = vmatpush.msra.mxu0 0.0
    %994 = vmatpush.msra.mxu0 %v91
    %995 = vmatpush.msra.mxu0 %v89
    %996 = vmatpush.msra.mxu0 %v87
    %997 = vmatpush.msra.mxu0 %v85
    %998 = vmatmul.f32.gmra.mxu0 %v980
    %v999 = vpop.f32.mrf.mxu0
    %v1000 = vadd.f32 0.0, %v999
    %1001 = vdwg.mxu0
    %1002 = vmatpush.msra.mxu0 0.0
    %1003 = vmatpush.msra.mxu0 0.0
    %1004 = vmatpush.msra.mxu0 0.0
    %1005 = vmatpush.msra.mxu0 0.0
    %1006 = vmatpush.msra.mxu0 0.0
    %1007 = vmatpush.msra.mxu0 0.0
    %1008 = vmatpush.msra.mxu0 0.0
    %1009 = vmatpush.msra.mxu0 0.0
    %1010 = vmatpush.msra.mxu0 0.0
    %1011 = vmatpush.msra.mxu0 0.0
    %1012 = vmatpush.msra.mxu0 0.0
    %1013 = vmatpush.msra.mxu0 0.0
    %1014 = vmatpush.msra.mxu0 %v92
    %1015 = vmatpush.msra.mxu0 %v90
    %1016 = vmatpush.msra.mxu0 %v88
    %1017 = vmatpush.msra.mxu0 %v86
    %1018 = vmatmul.f32.gmra.mxu0 %v980
    %v1019 = vpop.f32.mrf.mxu0
    %v1020 = vadd.f32 0.0, %v1019
    %1021 = vdwg.mxu0
    %v1022 = vadd.f32 %v912, %v1000
    %v1023 = vadd.f32 %v932, %v1020
    %v1024 = vtanh.pop %v1022
    %v1025 = vtanh.pop %v1023
    %v1026 = vmul.f32 %v1024, 0.5
    %v1027 = vmul.f32 %v1025, 0.5
    %v1028 = vadd.f32 %v1026, 0.5
    %v1029 = vadd.f32 %v1027, 0.5
    %v1030 = vmul.f32 %v1028, %v884
    %1032 = vrot.lane.b32.xlu0 %v1025, 64
    %v1033 = vpop.permute.xlu0 %1032
    %v1035 = vmul.f32 %v1028, %v1033
    %1037 = vrot.lane.b32.xlu0 %v1035, 64
    %v1038 = vpop.permute.xlu0 %1037
    %v1040 = vadd.f32 %v1030, %v1038
    %v1041 = vtanh.pop %v1040
    %1043 = vrot.lane.b32.xlu0 %v1041, 64
    %v1044 = vpop.permute.xlu0 %1043
    %v1046 = vmul.f32 %v1029, %v1044
    %v1048 = vsel %vm264, %v1046, 0
    %1050 = vmatpush.msra.mxu0 0.0
    %1051 = vmatpush.msra.mxu0 0.0
    %1052 = vmatpush.msra.mxu0 0.0
    %1053 = vmatpush.msra.mxu0 0.0
    %1054 = vmatpush.msra.mxu0 0.0
    %1055 = vmatpush.msra.mxu0 0.0
    %1056 = vmatpush.msra.mxu0 0.0
    %1057 = vmatpush.msra.mxu0 0.0
    %1058 = vmatpush.msra.mxu0 %v107
    %1059 = vmatpush.msra.mxu0 %v105
    %1060 = vmatpush.msra.mxu0 %v103
    %1061 = vmatpush.msra.mxu0 %v101
    %1062 = vmatpush.msra.mxu0 %v99
    %1063 = vmatpush.msra.mxu0 %v97
    %1064 = vmatpush.msra.mxu0 %v95
    %1065 = vmatpush.msra.mxu0 %v93
    %1066 = vmatmul.f32.gmra.mxu0 %v1048
    %v1067 = vpop.f32.mrf.mxu0
    %v1068 = vadd.f32 %v111, %v1067
    %1069 = vdwg.mxu0
    %1070 = vmatpush.msra.mxu0 0.0
    %1071 = vmatpush.msra.mxu0 0.0
    %1072 = vmatpush.msra.mxu0 0.0
    %1073 = vmatpush.msra.mxu0 0.0
    %1074 = vmatpush.msra.mxu0 0.0
    %1075 = vmatpush.msra.mxu0 0.0
    %1076 = vmatpush.msra.mxu0 0.0
    %1077 = vmatpush.msra.mxu0 0.0
    %1078 = vmatpush.msra.mxu0 %v108
    %1079 = vmatpush.msra.mxu0 %v106
    %1080 = vmatpush.msra.mxu0 %v104
    %1081 = vmatpush.msra.mxu0 %v102
    %1082 = vmatpush.msra.mxu0 %v100
    %1083 = vmatpush.msra.mxu0 %v98
    %1084 = vmatpush.msra.mxu0 %v96
    %1085 = vmatpush.msra.mxu0 %v94
    %1086 = vmatmul.f32.gmra.mxu0 %v1048
    %v1087 = vpop.f32.mrf.mxu0
    %v1088 = vadd.f32 %v112, %v1087
    %1089 = vdwg.mxu0
    %1090 = vst.msk [vmem:[#allocation2 + $0x5] sm:$0x1] %vm308, %v1046
    %1091 = vst.msk [vmem:[#allocation2 + $0xc] sm:$0x2] %vm310, %v1046
    %1092 = vmatpush.msra.mxu0 0.0
    %1093 = vmatpush.msra.mxu0 0.0
    %1094 = vmatpush.msra.mxu0 0.0
    %1095 = vmatpush.msra.mxu0 0.0
    %1096 = vmatpush.msra.mxu0 0.0
    %1097 = vmatpush.msra.mxu0 0.0
    %1098 = vmatpush.msra.mxu0 0.0
    %1099 = vmatpush.msra.mxu0 0.0
    %1100 = vmatpush.msra.mxu0 0.0
    %1101 = vmatpush.msra.mxu0 0.0
    %1102 = vmatpush.msra.mxu0 0.0
    %1103 = vmatpush.msra.mxu0 0.0
    %1104 = vmatpush.msra.mxu0 %v84
    %1105 = vmatpush.msra.mxu0 %v83
    %1106 = vmatpush.msra.mxu0 %v82
    %1107 = vmatpush.msra.mxu0 %v81
    %1108 = vmatmul.f32.gmra.mxu0 %v980
    %v1109 = vpop.f32.mrf.mxu0
    %v1110 = vadd.f32 0.0, %v1109
    %1111 = vdwg.mxu0
    %v1112 = vadd.f32 %v148, %v1110
    %v1113 = vtanh.pop %v1112
    %v1114 = vmul.f32 %v1113, 0.5
    %v1115 = vadd.f32 %v1114, 0.5
    %v1116 = vmul.f32 %v1115, %v970
    %1118 = vrot.lane.b32.xlu0 %v1113, 32
    %v1119 = vpop.permute.xlu0 %1118
    %v1121 = vmul.f32 %v1115, %v1119
    %1123 = vrot.lane.b32.xlu0 %v1121, 32
    %v1124 = vpop.permute.xlu0 %1123
    %v1126 = vadd.f32 %v1116, %v1124
    %v1127 = vtanh.pop %v1126
    %1129 = vrot.lane.b32.xlu0 %v1127, 32
    %v1130 = vpop.permute.xlu0 %1129
    %v1132 = vmul.f32 %v1115, %v1130
    %1134 = vrot.lane.b32.xlu0 %v1132, 64
    %v1135 = vpop.permute.xlu0 %1134
    %v1136 = vsel %vm124, %v1135, 0
    %1138 = vmatpush.msra.mxu0 0.0
    %1139 = vmatpush.msra.mxu0 0.0
    %1140 = vmatpush.msra.mxu0 0.0
    %1141 = vmatpush.msra.mxu0 0.0
    %1142 = vmatpush.msra.mxu0 0.0
    %1143 = vmatpush.msra.mxu0 0.0
    %1144 = vmatpush.msra.mxu0 0.0
    %1145 = vmatpush.msra.mxu0 0.0
    %1146 = vmatpush.msra.mxu0 0.0
    %1147 = vmatpush.msra.mxu0 0.0
    %1148 = vmatpush.msra.mxu0 0.0
    %1149 = vmatpush.msra.mxu0 0.0
    %1150 = vmatpush.msra.mxu0 %v91
    %1151 = vmatpush.msra.mxu0 %v89
    %1152 = vmatpush.msra.mxu0 %v87
    %1153 = vmatpush.msra.mxu0 %v85
    %1154 = vmatmul.f32.gmra.mxu0 %v1136
    %v1155 = vpop.f32.mrf.mxu0
    %v1156 = vadd.f32 0.0, %v1155
    %1157 = vdwg.mxu0
    %1158 = vmatpush.msra.mxu0 0.0
    %1159 = vmatpush.msra.mxu0 0.0
    %1160 = vmatpush.msra.mxu0 0.0
    %1161 = vmatpush.msra.mxu0 0.0
    %1162 = vmatpush.msra.mxu0 0.0
    %1163 = vmatpush.msra.mxu0 0.0
    %1164 = vmatpush.msra.mxu0 0.0
    %1165 = vmatpush.msra.mxu0 0.0
    %1166 = vmatpush.msra.mxu0 0.0
    %1167 = vmatpush.msra.mxu0 0.0
    %1168 = vmatpush.msra.mxu0 0.0
    %1169 = vmatpush.msra.mxu0 0.0
    %1170 = vmatpush.msra.mxu0 %v92
    %1171 = vmatpush.msra.mxu0 %v90
    %1172 = vmatpush.msra.mxu0 %v88
    %1173 = vmatpush.msra.mxu0 %v86
    %1174 = vmatmul.f32.gmra.mxu0 %v1136
    %v1175 = vpop.f32.mrf.mxu0
    %v1176 = vadd.f32 0.0, %v1175
    %1177 = vdwg.mxu0
    %v1178 = vadd.f32 %v1068, %v1156
    %v1179 = vadd.f32 %v1088, %v1176
    %v1180 = vtanh.pop %v1178
    %v1181 = vtanh.pop %v1179
    %v1182 = vmul.f32 %v1180, 0.5
    %v1183 = vmul.f32 %v1181, 0.5
    %v1184 = vadd.f32 %v1182, 0.5
    %v1185 = vadd.f32 %v1183, 0.5
    %v1186 = vmul.f32 %v1184, %v1040
    %1188 = vrot.lane.b32.xlu0 %v1181, 64
    %v1189 = vpop.permute.xlu0 %1188
    %v1191 = vmul.f32 %v1184, %v1189
    %1193 = vrot.lane.b32.xlu0 %v1191, 64
    %v1194 = vpop.permute.xlu0 %1193
    %v1196 = vadd.f32 %v1186, %v1194
    %v1197 = vtanh.pop %v1196
    %1199 = vrot.lane.b32.xlu0 %v1197, 64
    %v1200 = vpop.permute.xlu0 %1199
    %v1202 = vmul.f32 %v1185, %v1200
    %v1204 = vsel %vm264, %v1202, 0
    %1206 = vmatpush.msra.mxu0 0.0
    %1207 = vmatpush.msra.mxu0 0.0
    %1208 = vmatpush.msra.mxu0 0.0
    %1209 = vmatpush.msra.mxu0 0.0
    %1210 = vmatpush.msra.mxu0 0.0
    %1211 = vmatpush.msra.mxu0 0.0
    %1212 = vmatpush.msra.mxu0 0.0
    %1213 = vmatpush.msra.mxu0 0.0
    %1214 = vmatpush.msra.mxu0 %v107
    %1215 = vmatpush.msra.mxu0 %v105
    %1216 = vmatpush.msra.mxu0 %v103
    %1217 = vmatpush.msra.mxu0 %v101
    %1218 = vmatpush.msra.mxu0 %v99
    %1219 = vmatpush.msra.mxu0 %v97
    %1220 = vmatpush.msra.mxu0 %v95
    %1221 = vmatpush.msra.mxu0 %v93
    %1222 = vmatmul.f32.gmra.mxu0 %v1204
    %v1223 = vpop.f32.mrf.mxu0
    %v1224 = vadd.f32 %v111, %v1223
    %1225 = vdwg.mxu0
    %1226 = vmatpush.msra.mxu0 0.0
    %1227 = vmatpush.msra.mxu0 0.0
    %1228 = vmatpush.msra.mxu0 0.0
    %1229 = vmatpush.msra.mxu0 0.0
    %1230 = vmatpush.msra.mxu0 0.0
    %1231 = vmatpush.msra.mxu0 0.0
    %1232 = vmatpush.msra.mxu0 0.0
    %1233 = vmatpush.msra.mxu0 0.0
    %1234 = vmatpush.msra.mxu0 %v108
    %1235 = vmatpush.msra.mxu0 %v106
    %1236 = vmatpush.msra.mxu0 %v104
    %1237 = vmatpush.msra.mxu0 %v102
    %1238 = vmatpush.msra.mxu0 %v100
    %1239 = vmatpush.msra.mxu0 %v98
    %1240 = vmatpush.msra.mxu0 %v96
    %1241 = vmatpush.msra.mxu0 %v94
    %1242 = vmatmul.f32.gmra.mxu0 %v1204
    %v1243 = vpop.f32.mrf.mxu0
    %v1244 = vadd.f32 %v112, %v1243
    %1245 = vdwg.mxu0
    %1246 = vst.msk [vmem:[#allocation2 + $0x6] sm:$0x1] %vm308, %v1202
    %1247 = vst.msk [vmem:[#allocation2 + $0xd] sm:$0x2] %vm310, %v1202
    %1248 = vmatpush.msra.mxu0 0.0
    %1249 = vmatpush.msra.mxu0 0.0
    %1250 = vmatpush.msra.mxu0 0.0
    %1251 = vmatpush.msra.mxu0 0.0
    %1252 = vmatpush.msra.mxu0 0.0
    %1253 = vmatpush.msra.mxu0 0.0
    %1254 = vmatpush.msra.mxu0 0.0
    %1255 = vmatpush.msra.mxu0 0.0
    %1256 = vmatpush.msra.mxu0 0.0
    %1257 = vmatpush.msra.mxu0 0.0
    %1258 = vmatpush.msra.mxu0 0.0
    %1259 = vmatpush.msra.mxu0 0.0
    %1260 = vmatpush.msra.mxu0 %v84
    %1261 = vmatpush.msra.mxu0 %v83
    %1262 = vmatpush.msra.mxu0 %v82
    %1263 = vmatpush.msra.mxu0 %v81
    %1264 = vmatmul.f32.gmra.mxu0 %v1136
    %v1265 = vpop.f32.mrf.mxu0
    %v1266 = vadd.f32 0.0, %v1265
    %1267 = vdwg.mxu0
    %v1268 = vadd.f32 %v149, %v1266
    %v1269 = vtanh.pop %v1268
    %v1270 = vmul.f32 %v1269, 0.5
    %v1271 = vadd.f32 %v1270, 0.5
    %v1272 = vmul.f32 %v1271, %v1126
    %1274 = vrot.lane.b32.xlu0 %v1269, 32
    %v1275 = vpop.permute.xlu0 %1274
    %v1277 = vmul.f32 %v1271, %v1275
    %1279 = vrot.lane.b32.xlu0 %v1277, 32
    %v1280 = vpop.permute.xlu0 %1279
    %v1282 = vadd.f32 %v1272, %v1280
    %v1283 = vtanh.pop %v1282
    %1285 = vrot.lane.b32.xlu0 %v1283, 32
    %v1286 = vpop.permute.xlu0 %1285
    %v1288 = vmul.f32 %v1271, %v1286
    %1290 = vrot.lane.b32.xlu0 %v1288, 64
    %v1291 = vpop.permute.xlu0 %1290
    %v1292 = vsel %vm124, %v1291, 0
    %1294 = vmatpush.msra.mxu0 0.0
    %1295 = vmatpush.msra.mxu0 0.0
    %1296 = vmatpush.msra.mxu0 0.0
    %1297 = vmatpush.msra.mxu0 0.0
    %1298 = vmatpush.msra.mxu0 0.0
    %1299 = vmatpush.msra.mxu0 0.0
    %1300 = vmatpush.msra.mxu0 0.0
    %1301 = vmatpush.msra.mxu0 0.0
    %1302 = vmatpush.msra.mxu0 0.0
    %1303 = vmatpush.msra.mxu0 0.0
    %1304 = vmatpush.msra.mxu0 0.0
    %1305 = vmatpush.msra.mxu0 0.0
    %1306 = vmatpush.msra.mxu0 %v91
    %1307 = vmatpush.msra.mxu0 %v89
    %1308 = vmatpush.msra.mxu0 %v87
    %1309 = vmatpush.msra.mxu0 %v85
    %1310 = vmatmul.f32.gmra.mxu0 %v1292
    %v1311 = vpop.f32.mrf.mxu0
    %v1312 = vadd.f32 0.0, %v1311
    %1313 = vdwg.mxu0
    %1314 = vmatpush.msra.mxu0 0.0
    %1315 = vmatpush.msra.mxu0 0.0
    %1316 = vmatpush.msra.mxu0 0.0
    %1317 = vmatpush.msra.mxu0 0.0
    %1318 = vmatpush.msra.mxu0 0.0
    %1319 = vmatpush.msra.mxu0 0.0
    %1320 = vmatpush.msra.mxu0 0.0
    %1321 = vmatpush.msra.mxu0 0.0
    %1322 = vmatpush.msra.mxu0 0.0
    %1323 = vmatpush.msra.mxu0 0.0
    %1324 = vmatpush.msra.mxu0 0.0
    %1325 = vmatpush.msra.mxu0 0.0
    %1326 = vmatpush.msra.mxu0 %v92
    %1327 = vmatpush.msra.mxu0 %v90
    %1328 = vmatpush.msra.mxu0 %v88
    %1329 = vmatpush.msra.mxu0 %v86
    %1330 = vmatmul.f32.gmra.mxu0 %v1292
    %v1331 = vpop.f32.mrf.mxu0
    %v1332 = vadd.f32 0.0, %v1331
    %1333 = vdwg.mxu0
    %v1334 = vadd.f32 %v1224, %v1312
    %v1335 = vadd.f32 %v1244, %v1332
    %v1336 = vtanh.pop %v1334
    %v1337 = vtanh.pop %v1335
    %v1338 = vmul.f32 %v1336, 0.5
    %v1339 = vmul.f32 %v1337, 0.5
    %v1340 = vadd.f32 %v1338, 0.5
    %v1341 = vadd.f32 %v1339, 0.5
    %v1342 = vmul.f32 %v1340, %v1196
    %1344 = vrot.lane.b32.xlu0 %v1337, 64
    %v1345 = vpop.permute.xlu0 %1344
    %v1347 = vmul.f32 %v1340, %v1345
    %1349 = vrot.lane.b32.xlu0 %v1347, 64
    %v1350 = vpop.permute.xlu0 %1349
    %v1352 = vadd.f32 %v1342, %v1350
    %v1353 = vtanh.pop %v1352
    %1355 = vrot.lane.b32.xlu0 %v1353, 64
    %v1356 = vpop.permute.xlu0 %1355
    %v1358 = vmul.f32 %v1341, %v1356
    %1359 = vst.msk [vmem:[#allocation2 + $0x7] sm:$0x1] %vm308, %v1358
    %1360 = vst.msk [vmem:[#allocation2 + $0xe] sm:$0x2] %vm310, %v1358
    %v1361 = vld [vmem:[#allocation2] sm:$0xff]
    %v1362 = vld [vmem:[#allocation2 + $0x8] sm:$0xff]
    %v1363 = vld [vmem:[%s7] sm:$0xff]
    %v1364 = vld [vmem:[%s7 + $0x8] sm:$0xff]
    %v1365 = vld [vmem:[%s7 + $0x10] sm:$0xff]
    %v1366 = vld [vmem:[%s7 + $0x18] sm:$0xff]
    %v1367 = vld [vmem:[%s7 + $0x20] sm:$0xff]
    %v1368 = vld [vmem:[%s7 + $0x28] sm:$0xff]
    %v1369 = vld [vmem:[%s7 + $0x30] sm:$0xff]
    %v1370 = vld [vmem:[%s7 + $0x38] sm:$0xff]
    %v1371 = vld [vmem:[#allocation3] sm:$0x1]
    %v1373 = vperm.slane %v1371, 0
    %v1376 = vsel %vm264, %v1361, 0
    %v1379 = vsel %vm264, %v1362, 0
    %1381 = vmatpush.msra.mxu0 0.0
    %1382 = vmatpush.msra.mxu0 0.0
    %1383 = vmatpush.msra.mxu0 0.0
    %1384 = vmatpush.msra.mxu0 0.0
    %1385 = vmatpush.msra.mxu0 0.0
    %1386 = vmatpush.msra.mxu0 0.0
    %1387 = vmatpush.msra.mxu0 0.0
    %1388 = vmatpush.msra.mxu0 0.0
    %1389 = vmatpush.msra.mxu0 %v1370
    %1390 = vmatpush.msra.mxu0 %v1369
    %1391 = vmatpush.msra.mxu0 %v1368
    %1392 = vmatpush.msra.mxu0 %v1367
    %1393 = vmatpush.msra.mxu0 %v1366
    %1394 = vmatpush.msra.mxu0 %v1365
    %1395 = vmatpush.msra.mxu0 %v1364
    %1396 = vmatpush.msra.mxu0 %v1363
    %1397 = vmatmul.f32.gmra.mxu0 %v1376
    %v1398 = vpop.f32.mrf.mxu0
    %v1399 = vadd.f32 %v1373, %v1398
    %1400 = vmatmul.f32.gmra.mxu0 %v1379
    %v1401 = vpop.f32.mrf.mxu0
    %v1402 = vadd.f32 %v1373, %v1401
    %1403 = vdwg.mxu0
    %vm1404 = vcmask 7168
    %1405 = vst.msk [vmem:[%s9] sm:$0xff] %vm1404, %v1399
    %1406 = vst.msk [vmem:[%s9 + $0x8] sm:$0xff] %vm1404, %v1402
    // Predicated region
    $region50: #{tpu_custom_call.1} parent=1 // pred_check
      _
    $region51: #{tpu_custom_call.1} parent=1 // pred_check_branch
      %1408 = sbr.rel (0) target = $region53
    $region52: #{tpu_custom_call.1} parent=1 // pred_region
      _
    $region53: #{tpu_custom_call.1} parent=1 // pred_fallthru
      _
    // Predicated region
    $region54: #{tpu_custom_call.1} parent=1 // pred_check
      _
    $region55: #{tpu_custom_call.1} parent=1 // pred_check_branch
      %1410 = sbr.rel (0) target = $region57
    $region56: #{tpu_custom_call.1} parent=1 // pred_region
      _
    $region57: #{tpu_custom_call.1} parent=1 // pred_fallthru
      _
    %1411 = vsyncpa [#allocation5], 1
    %1412 = vsyncpa [#allocation7], 1

</llo_original>
